<compile_context>
chip_gen: v7x
topology: tpu7x:2x2x1
jax: 0.10.0
libtpu: 0.0.40
codegen_flags: <defaults>
</compile_context>

<pallas_src>
import jax
import jax.numpy as jnp
from jax.experimental import pallas as pl
from jax.experimental.pallas import tpu as pltpu


def _round_up(n, m):
    return (n + m - 1) // m * m


def _augru_recurrent_kernel(len_ref, xs_ref, h0_ref, wh_ref, bh_ref,
                            out_ref, hfin_ref, h_scr):
    """One (batch-tile, time-chunk) grid step of the AUGRU recurrence.

    len_ref : (TB, 1) int32   per-row valid lengths (constant over time)
    xs_ref  : (Tc, TB, 3H+1)  [x-projection incl. bias | attention score]
    h0_ref  : (TB, H)  f32    initial hidden state
    wh_ref  : (H, 3H)         recurrent weights (MXU dtype, VMEM resident)
    bh_ref  : (1, 3H)  f32    recurrent bias
    out_ref : (Tc, TB, H)     per-step hidden outputs (0 at padded steps)
    hfin_ref: (TB, H)         hidden state after each row's last valid step
    h_scr   : (TB, H)  f32    cross-chunk hidden-state carry
    """
    c = pl.program_id(1)
    tc = xs_ref.shape[0]
    H = hfin_ref.shape[-1]
    t0 = c * tc

    @pl.when(c == 0)
    def _init():
        h_scr[...] = h0_ref[...].astype(jnp.float32)

    lengths = len_ref[...]                           # (TB, 1) int32
    wh = wh_ref[...]                                 # (H, 3H), MXU dtype
    bh = bh_ref[...].astype(jnp.float32)             # (1, 3H)

    h = h_scr[...]                                   # f32 carried state (stays in vregs)
    for s in range(tc):                              # Tc is small & static: full unroll
        xs = xs_ref[s].astype(jnp.float32)           # (TB, 3H+1)
        xp = xs[:, :3 * H]                           # x @ Wx + bx  (gate order u, r, n)
        attn = xs[:, 3 * H:]                         # (TB, 1) attention score
        gh = jnp.dot(h.astype(wh.dtype), wh,
                     preferred_element_type=jnp.float32) + bh     # (TB, 3H) single dot
        u = jax.nn.sigmoid(xp[:, :H] + gh[:, :H]) * attn          # attentional update
        r = jax.nn.sigmoid(xp[:, H:2 * H] + gh[:, H:2 * H])
        n = jnp.tanh(xp[:, 2 * H:] + r * gh[:, 2 * H:])
        hy = h + u * (n - h)
        valid = (t0 + s) < lengths                   # (TB, 1) bool, computed in-kernel
        out_ref[s] = jnp.where(valid, hy, 0.0).astype(out_ref.dtype)
        h = jnp.where(valid, hy, h)                  # freeze rows past their length

    h_scr[...] = h                                   # carry to the next chunk

    @pl.when(c == pl.num_programs(1) - 1)
    def _fin():
        hfin_ref[...] = h.astype(hfin_ref.dtype)     # single store, last chunk only


def dynamic_gru_augru(x, attn, lengths, wx, wh, bx, bh, h0=None, time_chunk=16):
    """DynamicGRU (AUGRU) forward on TPU via Pallas.

    x: (T,B,D); attn: (T,B); lengths: (B,) int32; wx: (D,3H) == x2h.weight.T;
    wh: (H,3H) == h2h.weight.T; bx,bh: (3H,); h0: (B,H) or None (zeros).
    Gate order along the 3H axis is (update, reset, new), matching the PyTorch cell.
    Returns (outputs (T,B,H), h_final (B,H)).
    """
    T, B, D = x.shape
    H = wh.shape[0]
    assert wx.shape == (D, 3 * H) and wh.shape == (H, 3 * H)
    out_dtype = x.dtype
    # bf16 is the native MXU input dtype; keep f32 activations exactly f32.
    mxu_dtype = jnp.bfloat16 if x.dtype == jnp.bfloat16 else jnp.float32
    stream_dtype = x.dtype

    if h0 is None:
        h0 = jnp.zeros((B, H), jnp.float32)
    h0 = h0.astype(jnp.float32)

    # ---- Hoist the input projection out of the serial recurrence: one big, fully
    #      parallel matmul over all T*B rows. Fold attn into the same stream so the
    #      recurrent kernel consumes exactly one input block per grid step.
    xproj = (jnp.dot(x.reshape(T * B, D).astype(mxu_dtype), wx.astype(mxu_dtype),
                     precision=jax.lax.Precision.HIGHEST,
                     preferred_element_type=jnp.float32)
             + bx.astype(jnp.float32)).reshape(T, B, 3 * H)
    stream = jnp.concatenate(
        [xproj.astype(stream_dtype), attn[..., None].astype(stream_dtype)], axis=-1)

    # ---- Time chunking (amortize per-grid-step overhead; keep h in vregs per chunk).
    Tc = max(1, min(T, time_chunk))
    T_pad = _round_up(T, Tc)

    # ---- VMEM-budgeted batch tile: counts resident weights + double-buffered blocks.
    stream_it = jnp.dtype(stream_dtype).itemsize
    out_it = jnp.dtype(out_dtype).itemsize
    mxu_it = jnp.dtype(mxu_dtype).itemsize
    lanes_stream = _round_up(3 * H + 1, 128)
    lanes_h = _round_up(H, 128)
    lanes_3h = _round_up(3 * H, 128)
    try:
        vmem_cap = int(pltpu.get_tpu_info().vmem_capacity_bytes)
    except Exception:
        vmem_cap = 64 * 1024 * 1024                  # conservative: v7x per-core VMEM
    vmem_limit = int(min(vmem_cap * 3 // 4, 96 * 1024 * 1024))

    weight_bytes = 2 * (_round_up(H, 8) * lanes_3h * mxu_it + 8 * lanes_3h * 4)
    budget = vmem_limit - weight_bytes - (2 << 20)   # headroom for compiler scratch
    row_bytes = (2 * Tc * lanes_stream * stream_it   # streamed [xproj|attn] (x2 buffers)
                 + 2 * Tc * lanes_h * out_it         # outputs                (x2 buffers)
                 + 2 * 128 * 4                       # lengths
                 + 2 * lanes_h * 4                   # h0
                 + 2 * lanes_h * out_it              # h_final
                 + lanes_h * 4)                      # f32 hidden-state scratch
    align = 8 if stream_it >= 4 else (16 if stream_it == 2 else 32)
    TB = max(align, (budget // max(row_bytes, 1)) // align * align)
    if TB >= B:
        if B >= 512:
            # Keep >=2 batch tiles so the "parallel" axis can shard across TensorCores.
            TB = _round_up(-(-B // 2), align)
        else:
            TB = B
    B_pad = _round_up(B, TB)

    lengths2d = lengths.astype(jnp.int32).reshape(B, 1)
    if B_pad != B:
        pad = B_pad - B
        stream = jnp.pad(stream, ((0, 0), (0, pad), (0, 0)))
        lengths2d = jnp.pad(lengths2d, ((0, pad), (0, 0)))      # length 0 -> never valid
        h0 = jnp.pad(h0, ((0, pad), (0, 0)))
    if T_pad != T:
        stream = jnp.pad(stream, ((0, T_pad - T), (0, 0), (0, 0)))

    wh_k = wh.astype(mxu_dtype)
    bh_k = bh.astype(jnp.float32).reshape(1, 3 * H)

    grid = (B_pad // TB, T_pad // Tc)
    in_specs = [
        pl.BlockSpec((TB, 1), lambda b, c: (b, 0)),                  # lengths (per tile)
        pl.BlockSpec((Tc, TB, 3 * H + 1), lambda b, c: (c, b, 0)),   # [xproj | attn]
        pl.BlockSpec((TB, H), lambda b, c: (b, 0)),                  # h0 (per tile)
        pl.BlockSpec((H, 3 * H), lambda b, c: (0, 0)),               # wh (VMEM resident)
        pl.BlockSpec((1, 3 * H), lambda b, c: (0, 0)),               # bh (VMEM resident)
    ]
    out_specs = (
        pl.BlockSpec((Tc, TB, H), lambda b, c: (c, b, 0)),           # outputs
        pl.BlockSpec((TB, H), lambda b, c: (b, 0)),                  # h_final (resident)
    )
    out_shape = (
        jax.ShapeDtypeStruct((T_pad, B_pad, H), out_dtype),
        jax.ShapeDtypeStruct((B_pad, H), out_dtype),
    )

    flops = T_pad * B_pad * (2 * H * 3 * H + 16 * H)
    transcendentals = T_pad * B_pad * 3 * H
    bytes_accessed = (stream.size * stream_it + B_pad * 4 + B_pad * H * 4
                      + wh_k.size * mxu_it + 3 * H * 4
                      + (T_pad * B_pad * H + B_pad * H) * out_it)

    outputs, h_final = pl.pallas_call(
        _augru_recurrent_kernel,
        grid=grid,
        in_specs=in_specs,
        out_specs=out_specs,
        out_shape=out_shape,
        scratch_shapes=[pltpu.VMEM((TB, H), jnp.float32)],
        compiler_params=pltpu.CompilerParams(
            dimension_semantics=("parallel", "arbitrary"),
            vmem_limit_bytes=vmem_limit),
        cost_estimate=pl.CostEstimate(flops=int(flops),
                                      transcendentals=int(transcendentals),
                                      bytes_accessed=int(bytes_accessed)),
    )(lengths2d, stream, h0, wh_k, bh_k)

    return outputs[:T, :B], h_final[:B]


def _reference_dynamic_gru(x, attn, lengths, h0, wx, wh, bx, bh):
    """Pure-JAX translation of the PyTorch packed-sequence loop (AUGRU cell)."""
    T, B, _ = x.shape
    H = h0.shape[-1]
    hp = jax.lax.Precision.HIGHEST
    h = h0
    outputs = jnp.zeros((T, B, H), jnp.float32)
    out_h = jnp.zeros((B, H), jnp.float32)
    for t in range(T):
        bs = int(jnp.sum(lengths > t))
        xt, ht, at = x[t, :bs], h[:bs], attn[t, :bs]
        gate_x = jnp.dot(xt, wx, precision=hp) + bx
        gate_h = jnp.dot(ht, wh, precision=hp) + bh
        i_u, i_r, i_n = gate_x[:, :H], gate_x[:, H:2 * H], gate_x[:, 2 * H:]
        h_u, h_r, h_n = gate_h[:, :H], gate_h[:, H:2 * H], gate_h[:, 2 * H:]
        u = jax.nn.sigmoid(i_u + h_u) * at[:, None]
        r = jax.nn.sigmoid(i_r + h_r)
        n = jnp.tanh(i_n + r * h_n)
        hy = ht + u * (n - ht)
        outputs = outputs.at[t, :bs].set(hy)
        out_h = out_h.at[:bs].set(hy)
        h = h.at[:bs].set(hy)
    return outputs, out_h


if __name__ == "__main__":
    key = jax.random.PRNGKey(0)

    # ---------- f32 test (matches the PyTorch packed-sequence loop) ----------
    B, T, D, H = 8, 6, 16, 32
    kx, ka, kwx, kwh, kbx, kbh, k2 = jax.random.split(key, 7)
    # Sorted-descending lengths (all >= 1), as produced by pack_padded_sequence.
    lengths = jnp.array([6, 6, 5, 4, 3, 2, 2, 1], dtype=jnp.int32)
    mask = (jnp.arange(T)[:, None] < lengths[None, :]).astype(jnp.float32)
    x = jax.random.normal(kx, (T, B, D), jnp.float32) * mask[..., None]
    attn = jax.random.uniform(ka, (T, B), jnp.float32) * mask
    wx = jax.random.normal(kwx, (D, 3 * H), jnp.float32) * 0.2    # == x2h.weight.T
    wh = jax.random.normal(kwh, (H, 3 * H), jnp.float32) * 0.2    # == h2h.weight.T
    bx = jax.random.normal(kbx, (3 * H,), jnp.float32) * 0.1
    bh = jax.random.normal(kbh, (3 * H,), jnp.float32) * 0.1
    h0 = jnp.zeros((B, H), jnp.float32)

    out, hf = jax.block_until_ready(
        dynamic_gru_augru(x, attn, lengths, wx, wh, bx, bh, h0))
    ref_out, ref_h = _reference_dynamic_gru(x, attn, lengths, h0, wx, wh, bx, bh)
    assert out.shape == (T, B, H) and hf.shape == (B, H)
    assert jnp.allclose(out, ref_out, atol=1e-3, rtol=1e-3)
    assert jnp.allclose(hf, ref_h, atol=1e-3, rtol=1e-3)

    # ---------- bf16 test (exercises bf16 activations + bf16 MXU weights) ----------
    B2, T2, D2, H2 = 16, 8, 32, 32
    kx2, ka2, kwx2, kwh2, kbx2, kbh2 = jax.random.split(k2, 6)
    lengths2 = jnp.array([8, 8, 7, 7, 6, 5, 5, 4, 4, 3, 3, 2, 2, 2, 1, 1], jnp.int32)
    mask2 = (jnp.arange(T2)[:, None] < lengths2[None, :]).astype(jnp.float32)
    x2 = (jax.random.normal(kx2, (T2, B2, D2), jnp.float32)
          * mask2[..., None]).astype(jnp.bfloat16)
    attn2 = (jax.random.uniform(ka2, (T2, B2), jnp.float32) * mask2).astype(jnp.bfloat16)
    wx2 = jax.random.normal(kwx2, (D2, 3 * H2), jnp.float32) * 0.2
    wh2 = jax.random.normal(kwh2, (H2, 3 * H2), jnp.float32) * 0.2
    bx2 = jax.random.normal(kbx2, (3 * H2,), jnp.float32) * 0.1
    bh2 = jax.random.normal(kbh2, (3 * H2,), jnp.float32) * 0.1

    out2, hf2 = jax.block_until_ready(
        dynamic_gru_augru(x2, attn2, lengths2, wx2, wh2, bx2, bh2))
    ref_out2, ref_h2 = _reference_dynamic_gru(
        x2.astype(jnp.float32), attn2.astype(jnp.float32), lengths2,
        jnp.zeros((B2, H2), jnp.float32), wx2, wh2, bx2, bh2)
    assert out2.shape == (T2, B2, H2) and hf2.shape == (B2, H2)
    assert jnp.allclose(out2.astype(jnp.float32), ref_out2, atol=1e-1, rtol=1e-1)
    assert jnp.allclose(hf2.astype(jnp.float32), ref_h2, atol=1e-1, rtol=1e-1)

    print("KERNEL_OK")
</pallas_src>

<mosaic_0001>
module attributes {stable_mosaic.version = 11 : i64} {
  func.func @_augru_recurrent_kernel(%arg0: i32, %arg1: i32, %arg2: memref<8x1xi32, #tpu.memory_space<vmem>>, %arg3: memref<6x8x97xf32, #tpu.memory_space<vmem>>, %arg4: memref<8x32xf32, #tpu.memory_space<vmem>>, %arg5: memref<32x96xf32, #tpu.memory_space<vmem>>, %arg6: memref<1x96xf32, #tpu.memory_space<vmem>>, %arg7: memref<6x8x32xf32, #tpu.memory_space<vmem>>, %arg8: memref<8x32xf32, #tpu.memory_space<vmem>>, %arg9: memref<8x32xf32, #tpu.memory_space<vmem>>) attributes {dimension_semantics = [#tpu.dimension_semantics<parallel>, #tpu.dimension_semantics<arbitrary>], iteration_bounds = array<i64: 1, 1>, scalar_prefetch = 0 : i64, scratch_operands = 1 : i64, tpu.core_type = #tpu.core_type<tc>, window_params = [{transform_indices = @transform_0, window_bounds = array<i64: 8, 1>}, {transform_indices = @transform_1, window_bounds = array<i64: 6, 8, 97>}, {transform_indices = @transform_2, window_bounds = array<i64: 8, 32>}, {pipeline_mode = #tpu.pipeline_mode<synchronous>, transform_indices = @transform_3, window_bounds = array<i64: 32, 96>}, {pipeline_mode = #tpu.pipeline_mode<synchronous>, transform_indices = @transform_4, window_bounds = array<i64: 1, 96>}, {transform_indices = @transform_5, window_bounds = array<i64: 6, 8, 32>}, {transform_indices = @transform_6, window_bounds = array<i64: 8, 32>}]} {
    %c6_i32 = arith.constant 6 : i32
    %0 = arith.muli %arg1, %c6_i32 : i32
    %c0_i32 = arith.constant 0 : i32
    %1 = arith.cmpi eq, %arg1, %c0_i32 : i32
    %2 = arith.extui %1 : i1 to i32
    %c0_i32_0 = arith.constant 0 : i32
    %3 = arith.cmpi ne, %2, %c0_i32_0 : i32
    scf.if %3 {
      %c0_67 = arith.constant 0 : index
      %c0_68 = arith.constant 0 : index
      %288 = vector.load %arg4[%c0_67, %c0_68] : memref<8x32xf32, #tpu.memory_space<vmem>>, vector<8x32xf32>
      %c0_69 = arith.constant 0 : index
      %c0_70 = arith.constant 0 : index
      %289 = vector.load %arg9[%c0_69, %c0_70] : memref<8x32xf32, #tpu.memory_space<vmem>>, vector<8x32xf32>
      tpu.vector_store %arg9[%c0_69, %c0_70], %288 {strides = array<i32>} : memref<8x32xf32, #tpu.memory_space<vmem>>, vector<8x32xf32>,
    } else {
    }
    %c0 = arith.constant 0 : index
    %c0_1 = arith.constant 0 : index
    %4 = vector.load %arg2[%c0, %c0_1] : memref<8x1xi32, #tpu.memory_space<vmem>>, vector<8x1xi32>
    %c0_2 = arith.constant 0 : index
    %c0_3 = arith.constant 0 : index
    %5 = vector.load %arg5[%c0_2, %c0_3] : memref<32x96xf32, #tpu.memory_space<vmem>>, vector<32x96xf32>
    %c0_4 = arith.constant 0 : index
    %c0_5 = arith.constant 0 : index
    %6 = vector.load %arg6[%c0_4, %c0_5] : memref<1x96xf32, #tpu.memory_space<vmem>>, vector<1x96xf32>
    %c0_6 = arith.constant 0 : index
    %c0_7 = arith.constant 0 : index
    %7 = vector.load %arg9[%c0_6, %c0_7] : memref<8x32xf32, #tpu.memory_space<vmem>>, vector<8x32xf32>
    %c0_8 = arith.constant 0 : index
    %c0_9 = arith.constant 0 : index
    %c0_10 = arith.constant 0 : index
    %8 = vector.load %arg3[%c0_8, %c0_9, %c0_10] : memref<6x8x97xf32, #tpu.memory_space<vmem>>, vector<1x8x97xf32>
    %9 = vector.shape_cast %8 : vector<1x8x97xf32> to vector<8x97xf32>
    %10 = vector.extract_strided_slice %9 {offsets = [0, 0], sizes = [8, 96], strides = [1, 1]} : vector<8x97xf32> to vector<8x96xf32>
    %11 = vector.extract_strided_slice %9 {offsets = [0, 96], sizes = [8, 1], strides = [1, 1]} : vector<8x97xf32> to vector<8x1xf32>
    %cst = arith.constant dense<0.000000e+00> : vector<8x96xf32>
    %12 = tpu.matmul %7, %5, %cst {dimension_numbers = #tpu.dot_dimension_numbers<[1], [0], [0], [1], [0, 0, 1, 1], [], []>} : vector<8x32xf32>, vector<32x96xf32>, vector<8x96xf32> -> vector<8x96xf32>
    %13 = vector.broadcast %6 : vector<1x96xf32> to vector<8x96xf32>
    %14 = arith.addf %12, %13 : vector<8x96xf32>
    %15 = vector.extract_strided_slice %10 {offsets = [0, 0], sizes = [8, 32], strides = [1, 1]} : vector<8x96xf32> to vector<8x32xf32>
    %16 = vector.extract_strided_slice %14 {offsets = [0, 0], sizes = [8, 32], strides = [1, 1]} : vector<8x96xf32> to vector<8x32xf32>
    %17 = arith.addf %15, %16 : vector<8x32xf32>
    %18 = arith.negf %17 : vector<8x32xf32>
    %19 = math.exp %18 : vector<8x32xf32>
    %cst_11 = arith.constant 1.000000e+00 : f32
    %20 = vector.broadcast %cst_11 : f32 to vector<8x32xf32>
    %21 = arith.addf %20, %19 : vector<8x32xf32>
    %22 = arith.divf %20, %21 : vector<8x32xf32>
    %23 = vector.broadcast %11 : vector<8x1xf32> to vector<8x32xf32>
    %24 = arith.mulf %22, %23 : vector<8x32xf32>
    %25 = vector.extract_strided_slice %10 {offsets = [0, 32], sizes = [8, 32], strides = [1, 1]} : vector<8x96xf32> to vector<8x32xf32>
    %26 = vector.extract_strided_slice %14 {offsets = [0, 32], sizes = [8, 32], strides = [1, 1]} : vector<8x96xf32> to vector<8x32xf32>
    %27 = arith.addf %25, %26 : vector<8x32xf32>
    %28 = arith.negf %27 : vector<8x32xf32>
    %29 = math.exp %28 : vector<8x32xf32>
    %cst_12 = arith.constant 1.000000e+00 : f32
    %30 = vector.broadcast %cst_12 : f32 to vector<8x32xf32>
    %31 = arith.addf %30, %29 : vector<8x32xf32>
    %32 = arith.divf %30, %31 : vector<8x32xf32>
    %33 = vector.extract_strided_slice %10 {offsets = [0, 64], sizes = [8, 32], strides = [1, 1]} : vector<8x96xf32> to vector<8x32xf32>
    %34 = vector.extract_strided_slice %14 {offsets = [0, 64], sizes = [8, 32], strides = [1, 1]} : vector<8x96xf32> to vector<8x32xf32>
    %35 = arith.mulf %32, %34 : vector<8x32xf32>
    %36 = arith.addf %33, %35 : vector<8x32xf32>
    %37 = math.tanh %36 : vector<8x32xf32>
    %38 = arith.subf %37, %7 : vector<8x32xf32>
    %39 = arith.mulf %24, %38 : vector<8x32xf32>
    %40 = arith.addf %7, %39 : vector<8x32xf32>
    %c0_i32_13 = arith.constant 0 : i32
    %41 = arith.addi %0, %c0_i32_13 : i32
    %42 = vector.broadcast %41 : i32 to vector<8x1xi32>
    %43 = arith.cmpi slt, %42, %4 : vector<8x1xi32>
    %cst_14 = arith.constant 0.000000e+00 : f32
    %44 = vector.shape_cast %43 : vector<8x1xi1> to vector<8x1xi1>
    %45 = vector.broadcast %44 : vector<8x1xi1> to vector<8x32xi1>
    %46 = vector.broadcast %cst_14 : f32 to vector<8x32xf32>
    %47 = arith.select %45, %40, %46 : vector<8x32xi1>, vector<8x32xf32>
    %c0_15 = arith.constant 0 : index
    %c0_16 = arith.constant 0 : index
    %c0_17 = arith.constant 0 : index
    %48 = vector.load %arg7[%c0_15, %c0_16, %c0_17] : memref<6x8x32xf32, #tpu.memory_space<vmem>>, vector<1x8x32xf32>
    %49 = vector.shape_cast %48 : vector<1x8x32xf32> to vector<8x32xf32>
    %50 = vector.shape_cast %47 : vector<8x32xf32> to vector<1x8x32xf32>
    tpu.vector_store %arg7[%c0_15, %c0_16, %c0_17], %50 {strides = array<i32>} : memref<6x8x32xf32, #tpu.memory_space<vmem>>, vector<1x8x32xf32>,
    %51 = vector.shape_cast %43 : vector<8x1xi1> to vector<8x1xi1>
    %52 = vector.broadcast %51 : vector<8x1xi1> to vector<8x32xi1>
    %53 = arith.select %52, %40, %7 : vector<8x32xi1>, vector<8x32xf32>
    %c1 = arith.constant 1 : index
    %c0_18 = arith.constant 0 : index
    %c0_19 = arith.constant 0 : index
    %54 = vector.load %arg3[%c1, %c0_18, %c0_19] : memref<6x8x97xf32, #tpu.memory_space<vmem>>, vector<1x8x97xf32>
    %55 = vector.shape_cast %54 : vector<1x8x97xf32> to vector<8x97xf32>
    %56 = vector.extract_strided_slice %55 {offsets = [0, 0], sizes = [8, 96], strides = [1, 1]} : vector<8x97xf32> to vector<8x96xf32>
    %57 = vector.extract_strided_slice %55 {offsets = [0, 96], sizes = [8, 1], strides = [1, 1]} : vector<8x97xf32> to vector<8x1xf32>
    %cst_20 = arith.constant dense<0.000000e+00> : vector<8x96xf32>
    %58 = tpu.matmul %53, %5, %cst_20 {dimension_numbers = #tpu.dot_dimension_numbers<[1], [0], [0], [1], [0, 0, 1, 1], [], []>} : vector<8x32xf32>, vector<32x96xf32>, vector<8x96xf32> -> vector<8x96xf32>
    %59 = vector.broadcast %6 : vector<1x96xf32> to vector<8x96xf32>
    %60 = arith.addf %58, %59 : vector<8x96xf32>
    %61 = vector.extract_strided_slice %56 {offsets = [0, 0], sizes = [8, 32], strides = [1, 1]} : vector<8x96xf32> to vector<8x32xf32>
    %62 = vector.extract_strided_slice %60 {offsets = [0, 0], sizes = [8, 32], strides = [1, 1]} : vector<8x96xf32> to vector<8x32xf32>
    %63 = arith.addf %61, %62 : vector<8x32xf32>
    %64 = arith.negf %63 : vector<8x32xf32>
    %65 = math.exp %64 : vector<8x32xf32>
    %cst_21 = arith.constant 1.000000e+00 : f32
    %66 = vector.broadcast %cst_21 : f32 to vector<8x32xf32>
    %67 = arith.addf %66, %65 : vector<8x32xf32>
    %68 = arith.divf %66, %67 : vector<8x32xf32>
    %69 = vector.broadcast %57 : vector<8x1xf32> to vector<8x32xf32>
    %70 = arith.mulf %68, %69 : vector<8x32xf32>
    %71 = vector.extract_strided_slice %56 {offsets = [0, 32], sizes = [8, 32], strides = [1, 1]} : vector<8x96xf32> to vector<8x32xf32>
    %72 = vector.extract_strided_slice %60 {offsets = [0, 32], sizes = [8, 32], strides = [1, 1]} : vector<8x96xf32> to vector<8x32xf32>
    %73 = arith.addf %71, %72 : vector<8x32xf32>
    %74 = arith.negf %73 : vector<8x32xf32>
    %75 = math.exp %74 : vector<8x32xf32>
    %cst_22 = arith.constant 1.000000e+00 : f32
    %76 = vector.broadcast %cst_22 : f32 to vector<8x32xf32>
    %77 = arith.addf %76, %75 : vector<8x32xf32>
    %78 = arith.divf %76, %77 : vector<8x32xf32>
    %79 = vector.extract_strided_slice %56 {offsets = [0, 64], sizes = [8, 32], strides = [1, 1]} : vector<8x96xf32> to vector<8x32xf32>
    %80 = vector.extract_strided_slice %60 {offsets = [0, 64], sizes = [8, 32], strides = [1, 1]} : vector<8x96xf32> to vector<8x32xf32>
    %81 = arith.mulf %78, %80 : vector<8x32xf32>
    %82 = arith.addf %79, %81 : vector<8x32xf32>
    %83 = math.tanh %82 : vector<8x32xf32>
    %84 = arith.subf %83, %53 : vector<8x32xf32>
    %85 = arith.mulf %70, %84 : vector<8x32xf32>
    %86 = arith.addf %53, %85 : vector<8x32xf32>
    %c1_i32 = arith.constant 1 : i32
    %87 = arith.addi %0, %c1_i32 : i32
    %88 = vector.broadcast %87 : i32 to vector<8x1xi32>
    %89 = arith.cmpi slt, %88, %4 : vector<8x1xi32>
    %cst_23 = arith.constant 0.000000e+00 : f32
    %90 = vector.shape_cast %89 : vector<8x1xi1> to vector<8x1xi1>
    %91 = vector.broadcast %90 : vector<8x1xi1> to vector<8x32xi1>
    %92 = vector.broadcast %cst_23 : f32 to vector<8x32xf32>
    %93 = arith.select %91, %86, %92 : vector<8x32xi1>, vector<8x32xf32>
    %c1_24 = arith.constant 1 : index
    %c0_25 = arith.constant 0 : index
    %c0_26 = arith.constant 0 : index
    %94 = vector.load %arg7[%c1_24, %c0_25, %c0_26] : memref<6x8x32xf32, #tpu.memory_space<vmem>>, vector<1x8x32xf32>
    %95 = vector.shape_cast %94 : vector<1x8x32xf32> to vector<8x32xf32>
    %96 = vector.shape_cast %93 : vector<8x32xf32> to vector<1x8x32xf32>
    tpu.vector_store %arg7[%c1_24, %c0_25, %c0_26], %96 {strides = array<i32>} : memref<6x8x32xf32, #tpu.memory_space<vmem>>, vector<1x8x32xf32>,
    %97 = vector.shape_cast %89 : vector<8x1xi1> to vector<8x1xi1>
    %98 = vector.broadcast %97 : vector<8x1xi1> to vector<8x32xi1>
    %99 = arith.select %98, %86, %53 : vector<8x32xi1>, vector<8x32xf32>
    %c2 = arith.constant 2 : index
    %c0_27 = arith.constant 0 : index
    %c0_28 = arith.constant 0 : index
    %100 = vector.load %arg3[%c2, %c0_27, %c0_28] : memref<6x8x97xf32, #tpu.memory_space<vmem>>, vector<1x8x97xf32>
    %101 = vector.shape_cast %100 : vector<1x8x97xf32> to vector<8x97xf32>
    %102 = vector.extract_strided_slice %101 {offsets = [0, 0], sizes = [8, 96], strides = [1, 1]} : vector<8x97xf32> to vector<8x96xf32>
    %103 = vector.extract_strided_slice %101 {offsets = [0, 96], sizes = [8, 1], strides = [1, 1]} : vector<8x97xf32> to vector<8x1xf32>
    %cst_29 = arith.constant dense<0.000000e+00> : vector<8x96xf32>
    %104 = tpu.matmul %99, %5, %cst_29 {dimension_numbers = #tpu.dot_dimension_numbers<[1], [0], [0], [1], [0, 0, 1, 1], [], []>} : vector<8x32xf32>, vector<32x96xf32>, vector<8x96xf32> -> vector<8x96xf32>
    %105 = vector.broadcast %6 : vector<1x96xf32> to vector<8x96xf32>
    %106 = arith.addf %104, %105 : vector<8x96xf32>
    %107 = vector.extract_strided_slice %102 {offsets = [0, 0], sizes = [8, 32], strides = [1, 1]} : vector<8x96xf32> to vector<8x32xf32>
    %108 = vector.extract_strided_slice %106 {offsets = [0, 0], sizes = [8, 32], strides = [1, 1]} : vector<8x96xf32> to vector<8x32xf32>
    %109 = arith.addf %107, %108 : vector<8x32xf32>
    %110 = arith.negf %109 : vector<8x32xf32>
    %111 = math.exp %110 : vector<8x32xf32>
    %cst_30 = arith.constant 1.000000e+00 : f32
    %112 = vector.broadcast %cst_30 : f32 to vector<8x32xf32>
    %113 = arith.addf %112, %111 : vector<8x32xf32>
    %114 = arith.divf %112, %113 : vector<8x32xf32>
    %115 = vector.broadcast %103 : vector<8x1xf32> to vector<8x32xf32>
    %116 = arith.mulf %114, %115 : vector<8x32xf32>
    %117 = vector.extract_strided_slice %102 {offsets = [0, 32], sizes = [8, 32], strides = [1, 1]} : vector<8x96xf32> to vector<8x32xf32>
    %118 = vector.extract_strided_slice %106 {offsets = [0, 32], sizes = [8, 32], strides = [1, 1]} : vector<8x96xf32> to vector<8x32xf32>
    %119 = arith.addf %117, %118 : vector<8x32xf32>
    %120 = arith.negf %119 : vector<8x32xf32>
    %121 = math.exp %120 : vector<8x32xf32>
    %cst_31 = arith.constant 1.000000e+00 : f32
    %122 = vector.broadcast %cst_31 : f32 to vector<8x32xf32>
    %123 = arith.addf %122, %121 : vector<8x32xf32>
    %124 = arith.divf %122, %123 : vector<8x32xf32>
    %125 = vector.extract_strided_slice %102 {offsets = [0, 64], sizes = [8, 32], strides = [1, 1]} : vector<8x96xf32> to vector<8x32xf32>
    %126 = vector.extract_strided_slice %106 {offsets = [0, 64], sizes = [8, 32], strides = [1, 1]} : vector<8x96xf32> to vector<8x32xf32>
    %127 = arith.mulf %124, %126 : vector<8x32xf32>
    %128 = arith.addf %125, %127 : vector<8x32xf32>
    %129 = math.tanh %128 : vector<8x32xf32>
    %130 = arith.subf %129, %99 : vector<8x32xf32>
    %131 = arith.mulf %116, %130 : vector<8x32xf32>
    %132 = arith.addf %99, %131 : vector<8x32xf32>
    %c2_i32 = arith.constant 2 : i32
    %133 = arith.addi %0, %c2_i32 : i32
    %134 = vector.broadcast %133 : i32 to vector<8x1xi32>
    %135 = arith.cmpi slt, %134, %4 : vector<8x1xi32>
    %cst_32 = arith.constant 0.000000e+00 : f32
    %136 = vector.shape_cast %135 : vector<8x1xi1> to vector<8x1xi1>
    %137 = vector.broadcast %136 : vector<8x1xi1> to vector<8x32xi1>
    %138 = vector.broadcast %cst_32 : f32 to vector<8x32xf32>
    %139 = arith.select %137, %132, %138 : vector<8x32xi1>, vector<8x32xf32>
    %c2_33 = arith.constant 2 : index
    %c0_34 = arith.constant 0 : index
    %c0_35 = arith.constant 0 : index
    %140 = vector.load %arg7[%c2_33, %c0_34, %c0_35] : memref<6x8x32xf32, #tpu.memory_space<vmem>>, vector<1x8x32xf32>
    %141 = vector.shape_cast %140 : vector<1x8x32xf32> to vector<8x32xf32>
    %142 = vector.shape_cast %139 : vector<8x32xf32> to vector<1x8x32xf32>
    tpu.vector_store %arg7[%c2_33, %c0_34, %c0_35], %142 {strides = array<i32>} : memref<6x8x32xf32, #tpu.memory_space<vmem>>, vector<1x8x32xf32>,
    %143 = vector.shape_cast %135 : vector<8x1xi1> to vector<8x1xi1>
    %144 = vector.broadcast %143 : vector<8x1xi1> to vector<8x32xi1>
    %145 = arith.select %144, %132, %99 : vector<8x32xi1>, vector<8x32xf32>
    %c3 = arith.constant 3 : index
    %c0_36 = arith.constant 0 : index
    %c0_37 = arith.constant 0 : index
    %146 = vector.load %arg3[%c3, %c0_36, %c0_37] : memref<6x8x97xf32, #tpu.memory_space<vmem>>, vector<1x8x97xf32>
    %147 = vector.shape_cast %146 : vector<1x8x97xf32> to vector<8x97xf32>
    %148 = vector.extract_strided_slice %147 {offsets = [0, 0], sizes = [8, 96], strides = [1, 1]} : vector<8x97xf32> to vector<8x96xf32>
    %149 = vector.extract_strided_slice %147 {offsets = [0, 96], sizes = [8, 1], strides = [1, 1]} : vector<8x97xf32> to vector<8x1xf32>
    %cst_38 = arith.constant dense<0.000000e+00> : vector<8x96xf32>
    %150 = tpu.matmul %145, %5, %cst_38 {dimension_numbers = #tpu.dot_dimension_numbers<[1], [0], [0], [1], [0, 0, 1, 1], [], []>} : vector<8x32xf32>, vector<32x96xf32>, vector<8x96xf32> -> vector<8x96xf32>
    %151 = vector.broadcast %6 : vector<1x96xf32> to vector<8x96xf32>
    %152 = arith.addf %150, %151 : vector<8x96xf32>
    %153 = vector.extract_strided_slice %148 {offsets = [0, 0], sizes = [8, 32], strides = [1, 1]} : vector<8x96xf32> to vector<8x32xf32>
    %154 = vector.extract_strided_slice %152 {offsets = [0, 0], sizes = [8, 32], strides = [1, 1]} : vector<8x96xf32> to vector<8x32xf32>
    %155 = arith.addf %153, %154 : vector<8x32xf32>
    %156 = arith.negf %155 : vector<8x32xf32>
    %157 = math.exp %156 : vector<8x32xf32>
    %cst_39 = arith.constant 1.000000e+00 : f32
    %158 = vector.broadcast %cst_39 : f32 to vector<8x32xf32>
    %159 = arith.addf %158, %157 : vector<8x32xf32>
    %160 = arith.divf %158, %159 : vector<8x32xf32>
    %161 = vector.broadcast %149 : vector<8x1xf32> to vector<8x32xf32>
    %162 = arith.mulf %160, %161 : vector<8x32xf32>
    %163 = vector.extract_strided_slice %148 {offsets = [0, 32], sizes = [8, 32], strides = [1, 1]} : vector<8x96xf32> to vector<8x32xf32>
    %164 = vector.extract_strided_slice %152 {offsets = [0, 32], sizes = [8, 32], strides = [1, 1]} : vector<8x96xf32> to vector<8x32xf32>
    %165 = arith.addf %163, %164 : vector<8x32xf32>
    %166 = arith.negf %165 : vector<8x32xf32>
    %167 = math.exp %166 : vector<8x32xf32>
    %cst_40 = arith.constant 1.000000e+00 : f32
    %168 = vector.broadcast %cst_40 : f32 to vector<8x32xf32>
    %169 = arith.addf %168, %167 : vector<8x32xf32>
    %170 = arith.divf %168, %169 : vector<8x32xf32>
    %171 = vector.extract_strided_slice %148 {offsets = [0, 64], sizes = [8, 32], strides = [1, 1]} : vector<8x96xf32> to vector<8x32xf32>
    %172 = vector.extract_strided_slice %152 {offsets = [0, 64], sizes = [8, 32], strides = [1, 1]} : vector<8x96xf32> to vector<8x32xf32>
    %173 = arith.mulf %170, %172 : vector<8x32xf32>
    %174 = arith.addf %171, %173 : vector<8x32xf32>
    %175 = math.tanh %174 : vector<8x32xf32>
    %176 = arith.subf %175, %145 : vector<8x32xf32>
    %177 = arith.mulf %162, %176 : vector<8x32xf32>
    %178 = arith.addf %145, %177 : vector<8x32xf32>
    %c3_i32 = arith.constant 3 : i32
    %179 = arith.addi %0, %c3_i32 : i32
    %180 = vector.broadcast %179 : i32 to vector<8x1xi32>
    %181 = arith.cmpi slt, %180, %4 : vector<8x1xi32>
    %cst_41 = arith.constant 0.000000e+00 : f32
    %182 = vector.shape_cast %181 : vector<8x1xi1> to vector<8x1xi1>
    %183 = vector.broadcast %182 : vector<8x1xi1> to vector<8x32xi1>
    %184 = vector.broadcast %cst_41 : f32 to vector<8x32xf32>
    %185 = arith.select %183, %178, %184 : vector<8x32xi1>, vector<8x32xf32>
    %c3_42 = arith.constant 3 : index
    %c0_43 = arith.constant 0 : index
    %c0_44 = arith.constant 0 : index
    %186 = vector.load %arg7[%c3_42, %c0_43, %c0_44] : memref<6x8x32xf32, #tpu.memory_space<vmem>>, vector<1x8x32xf32>
    %187 = vector.shape_cast %186 : vector<1x8x32xf32> to vector<8x32xf32>
    %188 = vector.shape_cast %185 : vector<8x32xf32> to vector<1x8x32xf32>
    tpu.vector_store %arg7[%c3_42, %c0_43, %c0_44], %188 {strides = array<i32>} : memref<6x8x32xf32, #tpu.memory_space<vmem>>, vector<1x8x32xf32>,
    %189 = vector.shape_cast %181 : vector<8x1xi1> to vector<8x1xi1>
    %190 = vector.broadcast %189 : vector<8x1xi1> to vector<8x32xi1>
    %191 = arith.select %190, %178, %145 : vector<8x32xi1>, vector<8x32xf32>
    %c4 = arith.constant 4 : index
    %c0_45 = arith.constant 0 : index
    %c0_46 = arith.constant 0 : index
    %192 = vector.load %arg3[%c4, %c0_45, %c0_46] : memref<6x8x97xf32, #tpu.memory_space<vmem>>, vector<1x8x97xf32>
    %193 = vector.shape_cast %192 : vector<1x8x97xf32> to vector<8x97xf32>
    %194 = vector.extract_strided_slice %193 {offsets = [0, 0], sizes = [8, 96], strides = [1, 1]} : vector<8x97xf32> to vector<8x96xf32>
    %195 = vector.extract_strided_slice %193 {offsets = [0, 96], sizes = [8, 1], strides = [1, 1]} : vector<8x97xf32> to vector<8x1xf32>
    %cst_47 = arith.constant dense<0.000000e+00> : vector<8x96xf32>
    %196 = tpu.matmul %191, %5, %cst_47 {dimension_numbers = #tpu.dot_dimension_numbers<[1], [0], [0], [1], [0, 0, 1, 1], [], []>} : vector<8x32xf32>, vector<32x96xf32>, vector<8x96xf32> -> vector<8x96xf32>
    %197 = vector.broadcast %6 : vector<1x96xf32> to vector<8x96xf32>
    %198 = arith.addf %196, %197 : vector<8x96xf32>
    %199 = vector.extract_strided_slice %194 {offsets = [0, 0], sizes = [8, 32], strides = [1, 1]} : vector<8x96xf32> to vector<8x32xf32>
    %200 = vector.extract_strided_slice %198 {offsets = [0, 0], sizes = [8, 32], strides = [1, 1]} : vector<8x96xf32> to vector<8x32xf32>
    %201 = arith.addf %199, %200 : vector<8x32xf32>
    %202 = arith.negf %201 : vector<8x32xf32>
    %203 = math.exp %202 : vector<8x32xf32>
    %cst_48 = arith.constant 1.000000e+00 : f32
    %204 = vector.broadcast %cst_48 : f32 to vector<8x32xf32>
    %205 = arith.addf %204, %203 : vector<8x32xf32>
    %206 = arith.divf %204, %205 : vector<8x32xf32>
    %207 = vector.broadcast %195 : vector<8x1xf32> to vector<8x32xf32>
    %208 = arith.mulf %206, %207 : vector<8x32xf32>
    %209 = vector.extract_strided_slice %194 {offsets = [0, 32], sizes = [8, 32], strides = [1, 1]} : vector<8x96xf32> to vector<8x32xf32>
    %210 = vector.extract_strided_slice %198 {offsets = [0, 32], sizes = [8, 32], strides = [1, 1]} : vector<8x96xf32> to vector<8x32xf32>
    %211 = arith.addf %209, %210 : vector<8x32xf32>
    %212 = arith.negf %211 : vector<8x32xf32>
    %213 = math.exp %212 : vector<8x32xf32>
    %cst_49 = arith.constant 1.000000e+00 : f32
    %214 = vector.broadcast %cst_49 : f32 to vector<8x32xf32>
    %215 = arith.addf %214, %213 : vector<8x32xf32>
    %216 = arith.divf %214, %215 : vector<8x32xf32>
    %217 = vector.extract_strided_slice %194 {offsets = [0, 64], sizes = [8, 32], strides = [1, 1]} : vector<8x96xf32> to vector<8x32xf32>
    %218 = vector.extract_strided_slice %198 {offsets = [0, 64], sizes = [8, 32], strides = [1, 1]} : vector<8x96xf32> to vector<8x32xf32>
    %219 = arith.mulf %216, %218 : vector<8x32xf32>
    %220 = arith.addf %217, %219 : vector<8x32xf32>
    %221 = math.tanh %220 : vector<8x32xf32>
    %222 = arith.subf %221, %191 : vector<8x32xf32>
    %223 = arith.mulf %208, %222 : vector<8x32xf32>
    %224 = arith.addf %191, %223 : vector<8x32xf32>
    %c4_i32 = arith.constant 4 : i32
    %225 = arith.addi %0, %c4_i32 : i32
    %226 = vector.broadcast %225 : i32 to vector<8x1xi32>
    %227 = arith.cmpi slt, %226, %4 : vector<8x1xi32>
    %cst_50 = arith.constant 0.000000e+00 : f32
    %228 = vector.shape_cast %227 : vector<8x1xi1> to vector<8x1xi1>
    %229 = vector.broadcast %228 : vector<8x1xi1> to vector<8x32xi1>
    %230 = vector.broadcast %cst_50 : f32 to vector<8x32xf32>
    %231 = arith.select %229, %224, %230 : vector<8x32xi1>, vector<8x32xf32>
    %c4_51 = arith.constant 4 : index
    %c0_52 = arith.constant 0 : index
    %c0_53 = arith.constant 0 : index
    %232 = vector.load %arg7[%c4_51, %c0_52, %c0_53] : memref<6x8x32xf32, #tpu.memory_space<vmem>>, vector<1x8x32xf32>
    %233 = vector.shape_cast %232 : vector<1x8x32xf32> to vector<8x32xf32>
    %234 = vector.shape_cast %231 : vector<8x32xf32> to vector<1x8x32xf32>
    tpu.vector_store %arg7[%c4_51, %c0_52, %c0_53], %234 {strides = array<i32>} : memref<6x8x32xf32, #tpu.memory_space<vmem>>, vector<1x8x32xf32>,
    %235 = vector.shape_cast %227 : vector<8x1xi1> to vector<8x1xi1>
    %236 = vector.broadcast %235 : vector<8x1xi1> to vector<8x32xi1>
    %237 = arith.select %236, %224, %191 : vector<8x32xi1>, vector<8x32xf32>
    %c5 = arith.constant 5 : index
    %c0_54 = arith.constant 0 : index
    %c0_55 = arith.constant 0 : index
    %238 = vector.load %arg3[%c5, %c0_54, %c0_55] : memref<6x8x97xf32, #tpu.memory_space<vmem>>, vector<1x8x97xf32>
    %239 = vector.shape_cast %238 : vector<1x8x97xf32> to vector<8x97xf32>
    %240 = vector.extract_strided_slice %239 {offsets = [0, 0], sizes = [8, 96], strides = [1, 1]} : vector<8x97xf32> to vector<8x96xf32>
    %241 = vector.extract_strided_slice %239 {offsets = [0, 96], sizes = [8, 1], strides = [1, 1]} : vector<8x97xf32> to vector<8x1xf32>
    %cst_56 = arith.constant dense<0.000000e+00> : vector<8x96xf32>
    %242 = tpu.matmul %237, %5, %cst_56 {dimension_numbers = #tpu.dot_dimension_numbers<[1], [0], [0], [1], [0, 0, 1, 1], [], []>} : vector<8x32xf32>, vector<32x96xf32>, vector<8x96xf32> -> vector<8x96xf32>
    %243 = vector.broadcast %6 : vector<1x96xf32> to vector<8x96xf32>
    %244 = arith.addf %242, %243 : vector<8x96xf32>
    %245 = vector.extract_strided_slice %240 {offsets = [0, 0], sizes = [8, 32], strides = [1, 1]} : vector<8x96xf32> to vector<8x32xf32>
    %246 = vector.extract_strided_slice %244 {offsets = [0, 0], sizes = [8, 32], strides = [1, 1]} : vector<8x96xf32> to vector<8x32xf32>
    %247 = arith.addf %245, %246 : vector<8x32xf32>
    %248 = arith.negf %247 : vector<8x32xf32>
    %249 = math.exp %248 : vector<8x32xf32>
    %cst_57 = arith.constant 1.000000e+00 : f32
    %250 = vector.broadcast %cst_57 : f32 to vector<8x32xf32>
    %251 = arith.addf %250, %249 : vector<8x32xf32>
    %252 = arith.divf %250, %251 : vector<8x32xf32>
    %253 = vector.broadcast %241 : vector<8x1xf32> to vector<8x32xf32>
    %254 = arith.mulf %252, %253 : vector<8x32xf32>
    %255 = vector.extract_strided_slice %240 {offsets = [0, 32], sizes = [8, 32], strides = [1, 1]} : vector<8x96xf32> to vector<8x32xf32>
    %256 = vector.extract_strided_slice %244 {offsets = [0, 32], sizes = [8, 32], strides = [1, 1]} : vector<8x96xf32> to vector<8x32xf32>
    %257 = arith.addf %255, %256 : vector<8x32xf32>
    %258 = arith.negf %257 : vector<8x32xf32>
    %259 = math.exp %258 : vector<8x32xf32>
    %cst_58 = arith.constant 1.000000e+00 : f32
    %260 = vector.broadcast %cst_58 : f32 to vector<8x32xf32>
    %261 = arith.addf %260, %259 : vector<8x32xf32>
    %262 = arith.divf %260, %261 : vector<8x32xf32>
    %263 = vector.extract_strided_slice %240 {offsets = [0, 64], sizes = [8, 32], strides = [1, 1]} : vector<8x96xf32> to vector<8x32xf32>
    %264 = vector.extract_strided_slice %244 {offsets = [0, 64], sizes = [8, 32], strides = [1, 1]} : vector<8x96xf32> to vector<8x32xf32>
    %265 = arith.mulf %262, %264 : vector<8x32xf32>
    %266 = arith.addf %263, %265 : vector<8x32xf32>
    %267 = math.tanh %266 : vector<8x32xf32>
    %268 = arith.subf %267, %237 : vector<8x32xf32>
    %269 = arith.mulf %254, %268 : vector<8x32xf32>
    %270 = arith.addf %237, %269 : vector<8x32xf32>
    %c5_i32 = arith.constant 5 : i32
    %271 = arith.addi %0, %c5_i32 : i32
    %272 = vector.broadcast %271 : i32 to vector<8x1xi32>
    %273 = arith.cmpi slt, %272, %4 : vector<8x1xi32>
    %cst_59 = arith.constant 0.000000e+00 : f32
    %274 = vector.shape_cast %273 : vector<8x1xi1> to vector<8x1xi1>
    %275 = vector.broadcast %274 : vector<8x1xi1> to vector<8x32xi1>
    %276 = vector.broadcast %cst_59 : f32 to vector<8x32xf32>
    %277 = arith.select %275, %270, %276 : vector<8x32xi1>, vector<8x32xf32>
    %c5_60 = arith.constant 5 : index
    %c0_61 = arith.constant 0 : index
    %c0_62 = arith.constant 0 : index
    %278 = vector.load %arg7[%c5_60, %c0_61, %c0_62] : memref<6x8x32xf32, #tpu.memory_space<vmem>>, vector<1x8x32xf32>
    %279 = vector.shape_cast %278 : vector<1x8x32xf32> to vector<8x32xf32>
    %280 = vector.shape_cast %277 : vector<8x32xf32> to vector<1x8x32xf32>
    tpu.vector_store %arg7[%c5_60, %c0_61, %c0_62], %280 {strides = array<i32>} : memref<6x8x32xf32, #tpu.memory_space<vmem>>, vector<1x8x32xf32>,
    %281 = vector.shape_cast %273 : vector<8x1xi1> to vector<8x1xi1>
    %282 = vector.broadcast %281 : vector<8x1xi1> to vector<8x32xi1>
    %283 = arith.select %282, %270, %237 : vector<8x32xi1>, vector<8x32xf32>
    %c0_63 = arith.constant 0 : index
    %c0_64 = arith.constant 0 : index
    %284 = vector.load %arg9[%c0_63, %c0_64] : memref<8x32xf32, #tpu.memory_space<vmem>>, vector<8x32xf32>
    tpu.vector_store %arg9[%c0_63, %c0_64], %283 {strides = array<i32>} : memref<8x32xf32, #tpu.memory_space<vmem>>, vector<8x32xf32>,
    %c0_i32_65 = arith.constant 0 : i32
    %285 = arith.cmpi eq, %arg1, %c0_i32_65 : i32
    %286 = arith.extui %285 : i1 to i32
    %c0_i32_66 = arith.constant 0 : i32
    %287 = arith.cmpi ne, %286, %c0_i32_66 : i32
    scf.if %287 {
      %c0_67 = arith.constant 0 : index
      %c0_68 = arith.constant 0 : index
      %288 = vector.load %arg8[%c0_67, %c0_68] : memref<8x32xf32, #tpu.memory_space<vmem>>, vector<8x32xf32>
      tpu.vector_store %arg8[%c0_67, %c0_68], %283 {strides = array<i32>} : memref<8x32xf32, #tpu.memory_space<vmem>>, vector<8x32xf32>,
    } else {
    }
    return
  }
  func.func @transform_0(%arg0: i32, %arg1: i32) -> (i32, i32) {
    %c0_i32 = arith.constant 0 : i32
    %c0_i32_0 = arith.constant 0 : i32
    return %arg0, %c0_i32 : i32, i32
  }
  func.func @transform_1(%arg0: i32, %arg1: i32) -> (i32, i32, i32) {
    %c0_i32 = arith.constant 0 : i32
    %c0_i32_0 = arith.constant 0 : i32
    return %arg1, %arg0, %c0_i32 : i32, i32, i32
  }
  func.func @transform_2(%arg0: i32, %arg1: i32) -> (i32, i32) {
    %c0_i32 = arith.constant 0 : i32
    %c0_i32_0 = arith.constant 0 : i32
    return %arg0, %c0_i32 : i32, i32
  }
  func.func @transform_3(%arg0: i32, %arg1: i32) -> (i32, i32) {
    %c0_i32 = arith.constant 0 : i32
    %c0_i32_0 = arith.constant 0 : i32
    %c0_i32_1 = arith.constant 0 : i32
    return %c0_i32, %c0_i32_0 : i32, i32
  }
  func.func @transform_4(%arg0: i32, %arg1: i32) -> (i32, i32) {
    %c0_i32 = arith.constant 0 : i32
    %c0_i32_0 = arith.constant 0 : i32
    %c0_i32_1 = arith.constant 0 : i32
    return %c0_i32, %c0_i32_0 : i32, i32
  }
  func.func @transform_5(%arg0: i32, %arg1: i32) -> (i32, i32, i32) {
    %c0_i32 = arith.constant 0 : i32
    %c0_i32_0 = arith.constant 0 : i32
    return %arg1, %arg0, %c0_i32 : i32, i32, i32
  }
  func.func @transform_6(%arg0: i32, %arg1: i32) -> (i32, i32) {
    %c0_i32 = arith.constant 0 : i32
    %c0_i32_0 = arith.constant 0 : i32
    return %arg0, %c0_i32 : i32, i32
  }
}

</mosaic_0001>

<llo_original>
// kernel: tpu_custom_call.1
$region0: #{tpu_custom_call.1}
  #allocation0 [shape = 'u32[]', space=smem, size = 0x4, offset = 0x4, fixed_abs, tag = 'smem constant byte address 0x4 - core index']
  #allocation1 [shape = 'u32[144,128]{1,0:T(1,128)}', space=vmem, size = 0x12000, scoped, tag = 'internal scratch']
  #allocation2 [shape = 'f32[8,32]{1,0:T(8,128)}', space=vmem, size = 0x1000, scoped, tag = 'scratch operand']
  %s0 = inlined_call_operand.vmem [shape: s32[8,1], index: 0, kind: input, shape index: {}]
  %s1 = inlined_call_operand.hbm [shape: f32[6,8,97], index: 1, kind: input, shape index: {}]
  %s2 = inlined_call_operand.vmem [shape: f32[8,32], index: 2, kind: input, shape index: {}]
  %s3 = inlined_call_operand.hbm [shape: f32[32,96], index: 3, kind: input, shape index: {}]
  %s4 = inlined_call_operand.vmem [shape: f32[1,96], index: 4, kind: input, shape index: {}]
  %s5 = inlined_call_operand.hbm [shape: f32[6,8,32], index: 5, kind: output, shape index: {0}]
  %s6 = inlined_call_operand.hbm [shape: f32[8,32], index: 6, kind: output, shape index: {1}]
  %7 = xla_tuple %s5, %s6
  %s8 = sld [smem:[#allocation0]]
  $region54: #{tpu_custom_call.1} parent=0
    _
  %s10 = ssub.s32 1, %s8
  %s11 = scalar_select 0, %s10, %s8
  $region1: #{tpu_custom_call.1} parent=0
    #allocation3 [shape = 'u8[24576]{0}', space=vmem, size = 0x6000, scoped, tag = 'input window, operand 1, single buffered']
    #allocation4 [shape = 's32[1]{0}', space=sflag, size = 0x4, scoped, tag = 'scoped memory for tpu_custom_call.1']
    #allocation5 [shape = 's32[1]{0}', space=sflag, size = 0x4, scoped, tag = 'scoped memory for tpu_custom_call.1']
    #allocation6 [shape = 'u8[16384]{0}', space=vmem, size = 0x4000, scoped, tag = 'input window, operand 3, single buffered']
    #allocation7 [shape = 's32[1]{0}', space=sflag, size = 0x4, scoped, tag = 'scoped memory for tpu_custom_call.1']
    #allocation8 [shape = 'u8[24576]{0}', space=vmem, size = 0x6000, scoped, tag = 'output window, operand 0, single buffered']
    #allocation9 [shape = 'u8[4096]{0}', space=vmem, size = 0x1000, scoped, tag = 'output window, operand 1, single buffered']
    #allocation10 [shape = 's32[1]{0}', space=sflag, size = 0x4, scoped, tag = 'scoped memory for tpu_custom_call.1']
    %12 = vsyncpa [#allocation4], 0
    %13 = vsyncpa [#allocation7], 0
    %14 = vsyncpa [#allocation5], 0
    %15 = vsyncpa [#allocation10], 0
    // Predicated region
    $region2: #{tpu_custom_call.1} parent=1 // pred_check
      _
    $region3: #{tpu_custom_call.1} parent=1 // pred_check_branch
      %17 = sbr.rel (0) target = $region5
    $region4: #{tpu_custom_call.1} parent=1 // pred_region
      _
    $region5: #{tpu_custom_call.1} parent=1 // pred_fallthru
      _
    // Predicated region
    $region6: #{tpu_custom_call.1} parent=1 // pred_check
      _
    $region7: #{tpu_custom_call.1} parent=1 // pred_check_branch
      %19 = sbr.rel (0) target = $region9
    $region8: #{tpu_custom_call.1} parent=1 // pred_region
      %s21 = ssub.s32 768, 768
      %22 = vsyncadd [#allocation4], %s21
      %s23 = sshll.u32 [#allocation3], 4
      %s24 = int_to_ptr.vmem [resolvable:$true] %s23
      %29 = dma.hbm_to_vmem [thread:$0]  %s1, 768, %s24, [#allocation4], 128, 128, 8
    $region9: #{tpu_custom_call.1} parent=1 // pred_fallthru
      _
    // Predicated region
    $region10: #{tpu_custom_call.1} parent=1 // pred_check
      _
    $region11: #{tpu_custom_call.1} parent=1 // pred_check_branch
      %31 = sbr.rel (0) target = $region13
    $region12: #{tpu_custom_call.1} parent=1 // pred_region
      _
    $region13: #{tpu_custom_call.1} parent=1 // pred_fallthru
      _
    // Predicated region
    $region14: #{tpu_custom_call.1} parent=1 // pred_check
      _
    $region15: #{tpu_custom_call.1} parent=1 // pred_check_branch
      %33 = sbr.rel (0) target = $region17
    $region16: #{tpu_custom_call.1} parent=1 // pred_region
      %s35 = ssub.s32 512, 512
      %36 = vsyncadd [#allocation7], %s35
      %s37 = sshll.u32 [#allocation6], 4
      %s38 = int_to_ptr.vmem [resolvable:$true] %s37
      %43 = dma.hbm_to_vmem [thread:$0]  %s3, 512, %s38, [#allocation7], 128, 128, 8
    $region17: #{tpu_custom_call.1} parent=1 // pred_fallthru
      _
    // Predicated region
    $region18: #{tpu_custom_call.1} parent=1 // pred_check
      _
    $region19: #{tpu_custom_call.1} parent=1 // pred_check_branch
      %45 = sbr.rel (0) target = $region21
    $region20: #{tpu_custom_call.1} parent=1 // pred_region
      _
    $region21: #{tpu_custom_call.1} parent=1 // pred_fallthru
      _
    // Predicated region
    $region22: #{tpu_custom_call.1} parent=1 // pred_check
      _
    $region23: #{tpu_custom_call.1} parent=1 // pred_check_branch
      %47 = sbr.rel (0) target = $region25
    $region24: #{tpu_custom_call.1} parent=1 // pred_region
      %48 = dma.done [#allocation4], 768
    $region25: #{tpu_custom_call.1} parent=1 // pred_fallthru
      _
    // Predicated region
    $region26: #{tpu_custom_call.1} parent=1 // pred_check
      _
    $region27: #{tpu_custom_call.1} parent=1 // pred_check_branch
      %50 = sbr.rel (0) target = $region29
    $region28: #{tpu_custom_call.1} parent=1 // pred_region
      %51 = dma.done [#allocation7], 512
    $region29: #{tpu_custom_call.1} parent=1 // pred_fallthru
      _
    %s52 = smul.u32 0, 6
    %p53 = scmp.eq.s32.totalorder 0, 0
    // Predicated region
    $region30: #{tpu_custom_call.1} parent=1 // pred_check
      %p54 = pneg %p53
    $region31: #{tpu_custom_call.1} parent=1 // pred_check_branch
      %56 = sbr.rel (%p54) target = $region33
    $region32: #{tpu_custom_call.1} parent=1 // pred_region
      %v57 = vld [vmem:[%s2] sm:$0xff]
      %vm58 = vcmask 261120
      %59 = vst.msk [vmem:[#allocation2] sm:$0xff] %vm58, %v57
    $region33: #{tpu_custom_call.1} parent=1 // pred_fallthru
      _
    %v60 = vld [vmem:[%s0] sm:$0xff]
    %v61 = vld [vmem:[#allocation6] sm:$0xff]
    %v62 = vld [vmem:[#allocation6 + $0x8] sm:$0xff]
    %v63 = vld [vmem:[#allocation6 + $0x10] sm:$0xff]
    %v64 = vld [vmem:[#allocation6 + $0x18] sm:$0xff]
    %v65 = vld [vmem:[%s4] sm:$0x1]
    %v66 = vld [vmem:[#allocation2] sm:$0xff]
    %v67 = vld [vmem:[#allocation3] sm:$0xff]
    %v69 = vlaneseq
    %v70 = vshrl.u32 %v69, 7
    %v71 = vsub.s32 0, %v70
    %v72 = vrot.slane %v65, %v71
    %vm74 = vcmask 261120
    %v76 = vsel %vm74, %v66, 0
    %78 = vmatprep.subr.mxu0 0.0
    %79 = vmatpush1.msra.mxu0 %v61
    %80 = vmatprep.subr.mxu0 0.0
    %81 = vmatpush1.msra.mxu0 %v62
    %82 = vmatprep.subr.mxu0 0.0
    %83 = vmatpush1.msra.mxu0 %v63
    %84 = vmatprep.subr.mxu0 0.0
    %85 = vmatpush1.msra.mxu0 %v64
    %86 = vmatprep.subr.mxu0 0.0
    %87 = vmatpush1.msra.mxu0 0.0
    %88 = vmatprep.subr.mxu0 0.0
    %89 = vmatpush1.msra.mxu0 0.0
    %90 = vmatprep.subr.mxu0 0.0
    %91 = vmatpush1.msra.mxu0 0.0
    %92 = vmatprep.subr.mxu0 0.0
    %93 = vmatpush1.msra.mxu0 0.0
    %94 = vmatprep.subr.mxu0 0.0
    %95 = vmatpush1.msra.mxu0 0.0
    %96 = vmatprep.subr.mxu0 0.0
    %97 = vmatpush1.msra.mxu0 0.0
    %98 = vmatprep.subr.mxu0 0.0
    %99 = vmatpush1.msra.mxu0 0.0
    %100 = vmatprep.subr.mxu0 0.0
    %101 = vmatpush1.msra.mxu0 0.0
    %102 = vmatprep.subr.mxu0 0.0
    %103 = vmatpush1.msra.mxu0 0.0
    %104 = vmatprep.subr.mxu0 0.0
    %105 = vmatpush1.msra.mxu0 0.0
    %106 = vmatprep.subr.mxu0 0.0
    %107 = vmatpush1.msra.mxu0 0.0
    %108 = vmatprep.subr.mxu0 0.0
    %109 = vmatpush1.msra.mxu0 0.0
    %110 = vmatprep.subr.mxu0 0.0
    %111 = vmatpush1.msra.mxu0 0.0
    %112 = vmatprep.subr.mxu0 0.0
    %113 = vmatpush1.msra.mxu0 0.0
    %114 = vmatprep.subr.mxu0 0.0
    %115 = vmatpush1.msra.mxu0 0.0
    %116 = vmatprep.subr.mxu0 0.0
    %117 = vmatpush1.msra.mxu0 0.0
    %118 = vmatprep.subr.mxu0 0.0
    %119 = vmatpush1.msra.mxu0 0.0
    %120 = vmatprep.subr.mxu0 0.0
    %121 = vmatpush1.msra.mxu0 0.0
    %122 = vmatprep.subr.mxu0 0.0
    %123 = vmatpush1.msra.mxu0 0.0
    %124 = vmatprep.subr.mxu0 0.0
    %125 = vmatpush1.msra.mxu0 0.0
    %126 = vmatprep.subr.mxu0 0.0
    %127 = vmatpush1.msra.mxu0 0.0
    %128 = vmatprep.subr.mxu0 0.0
    %129 = vmatpush1.msra.mxu0 0.0
    %130 = vmatprep.subr.mxu0 0.0
    %131 = vmatpush1.msra.mxu0 0.0
    %132 = vmatprep.subr.mxu0 0.0
    %133 = vmatpush1.msra.mxu0 0.0
    %134 = vmatprep.subr.mxu0 0.0
    %135 = vmatpush1.msra.mxu0 0.0
    %136 = vmatprep.subr.mxu0 0.0
    %137 = vmatpush1.msra.mxu0 0.0
    %138 = vmatprep.subr.mxu0 0.0
    %139 = vmatpush1.msra.mxu0 0.0
    %140 = vmatprep.subr.mxu0 0.0
    %141 = vmatpush1.msra.mxu0 0.0
    %142 = vmatprep.mubr.f32.mxu0 0.0
    %143 = vmatmul.mubr.f32.gmra.mrb[0].mxu0 %v76
    %v144 = vpop.f32.mrb[0].mxu0
    %v145 = vadd.f32 %v72, %v144
    %v146 = vpop.f32.mrb[0].mxu0
    %147 = vdwg.mxu0
    %v148 = vadd.f32 %v67, %v145
    %v149 = vxor.u32 %v148, 2147483648
    %v150 = vmul.f32 %v149, 1.442695
    %v151 = vpow.pop %v150
    %v152 = vadd.f32 %v151, 1.0
    %v153 = vrcp.pop %v152
    %v154 = vmul.f32 1.0, %v153
    %156 = vset.pattern.permute.xlu0 96
    %157 = vperm.xlu0 %156, %v67
    %v158 = vpop.permute.xlu0 %157
    %v160 = vmul.f32 %v154, %v158
    %162 = vrot.lane.b32.xlu0 %v145, 96
    %v163 = vpop.permute.xlu0 %162
    %v165 = vmul.f32 %v154, %v163
    %167 = vrot.lane.b32.xlu0 %v165, 32
    %v168 = vpop.permute.xlu0 %167
    %v170 = vadd.f32 %v67, %v168
    %v171 = vtanh.pop %v170
    %172 = vrot.lane.b32.xlu0 %v66, 64
    %v173 = vpop.permute.xlu0 %172
    %v175 = vsub.f32 %v171, %v173
    %177 = vrot.lane.b32.xlu0 %v175, 64
    %v178 = vpop.permute.xlu0 %177
    %v180 = vmul.f32 %v160, %v178
    %v181 = vadd.f32 %v66, %v180
    %v182 = vstv %s52
    %vm183 = vcmp.lt.s32.totalorder %v182, %v60
    %v184 = vsel %vm183, 1, 0
    %185 = vset.pattern.permute.xlu0 0
    %186 = vperm.xlu0 %185, %v184
    %v187 = vpop.permute.xlu0 %186
    %vm188 = vcmp.eq.s32.totalorder %v187, 1
    %v189 = vsel %vm188, %v181, 0.0
    %190 = vst.msk [vmem:[#allocation8] sm:$0xff] %vm74, %v189
    %v191 = vsel %vm188, %v181, %v66
    %s192 = scalar_lea.vmem [#allocation3], 8
    %v193 = vld [vmem:[%s192] sm:$0xff]
    %v195 = vsel %vm74, %v191, 0
    %197 = vmatprep.subr.mxu0 0.0
    %198 = vmatpush1.msra.mxu0 %v61
    %199 = vmatprep.subr.mxu0 0.0
    %200 = vmatpush1.msra.mxu0 %v62
    %201 = vmatprep.subr.mxu0 0.0
    %202 = vmatpush1.msra.mxu0 %v63
    %203 = vmatprep.subr.mxu0 0.0
    %204 = vmatpush1.msra.mxu0 %v64
    %205 = vmatprep.subr.mxu0 0.0
    %206 = vmatpush1.msra.mxu0 0.0
    %207 = vmatprep.subr.mxu0 0.0
    %208 = vmatpush1.msra.mxu0 0.0
    %209 = vmatprep.subr.mxu0 0.0
    %210 = vmatpush1.msra.mxu0 0.0
    %211 = vmatprep.subr.mxu0 0.0
    %212 = vmatpush1.msra.mxu0 0.0
    %213 = vmatprep.subr.mxu0 0.0
    %214 = vmatpush1.msra.mxu0 0.0
    %215 = vmatprep.subr.mxu0 0.0
    %216 = vmatpush1.msra.mxu0 0.0
    %217 = vmatprep.subr.mxu0 0.0
    %218 = vmatpush1.msra.mxu0 0.0
    %219 = vmatprep.subr.mxu0 0.0
    %220 = vmatpush1.msra.mxu0 0.0
    %221 = vmatprep.subr.mxu0 0.0
    %222 = vmatpush1.msra.mxu0 0.0
    %223 = vmatprep.subr.mxu0 0.0
    %224 = vmatpush1.msra.mxu0 0.0
    %225 = vmatprep.subr.mxu0 0.0
    %226 = vmatpush1.msra.mxu0 0.0
    %227 = vmatprep.subr.mxu0 0.0
    %228 = vmatpush1.msra.mxu0 0.0
    %229 = vmatprep.subr.mxu0 0.0
    %230 = vmatpush1.msra.mxu0 0.0
    %231 = vmatprep.subr.mxu0 0.0
    %232 = vmatpush1.msra.mxu0 0.0
    %233 = vmatprep.subr.mxu0 0.0
    %234 = vmatpush1.msra.mxu0 0.0
    %235 = vmatprep.subr.mxu0 0.0
    %236 = vmatpush1.msra.mxu0 0.0
    %237 = vmatprep.subr.mxu0 0.0
    %238 = vmatpush1.msra.mxu0 0.0
    %239 = vmatprep.subr.mxu0 0.0
    %240 = vmatpush1.msra.mxu0 0.0
    %241 = vmatprep.subr.mxu0 0.0
    %242 = vmatpush1.msra.mxu0 0.0
    %243 = vmatprep.subr.mxu0 0.0
    %244 = vmatpush1.msra.mxu0 0.0
    %245 = vmatprep.subr.mxu0 0.0
    %246 = vmatpush1.msra.mxu0 0.0
    %247 = vmatprep.subr.mxu0 0.0
    %248 = vmatpush1.msra.mxu0 0.0
    %249 = vmatprep.subr.mxu0 0.0
    %250 = vmatpush1.msra.mxu0 0.0
    %251 = vmatprep.subr.mxu0 0.0
    %252 = vmatpush1.msra.mxu0 0.0
    %253 = vmatprep.subr.mxu0 0.0
    %254 = vmatpush1.msra.mxu0 0.0
    %255 = vmatprep.subr.mxu0 0.0
    %256 = vmatpush1.msra.mxu0 0.0
    %257 = vmatprep.subr.mxu0 0.0
    %258 = vmatpush1.msra.mxu0 0.0
    %259 = vmatprep.subr.mxu0 0.0
    %260 = vmatpush1.msra.mxu0 0.0
    %261 = vmatprep.mubr.f32.mxu0 0.0
    %262 = vmatmul.mubr.f32.gmra.mrb[0].mxu0 %v195
    %v263 = vpop.f32.mrb[0].mxu0
    %v264 = vadd.f32 %v72, %v263
    %v265 = vpop.f32.mrb[0].mxu0
    %266 = vdwg.mxu0
    %v267 = vadd.f32 %v193, %v264
    %v268 = vxor.u32 %v267, 2147483648
    %v269 = vmul.f32 %v268, 1.442695
    %v270 = vpow.pop %v269
    %v271 = vadd.f32 %v270, 1.0
    %v272 = vrcp.pop %v271
    %v273 = vmul.f32 1.0, %v272
    %275 = vset.pattern.permute.xlu0 96
    %276 = vperm.xlu0 %275, %v193
    %v277 = vpop.permute.xlu0 %276
    %v279 = vmul.f32 %v273, %v277
    %281 = vrot.lane.b32.xlu0 %v264, 96
    %v282 = vpop.permute.xlu0 %281
    %v284 = vmul.f32 %v273, %v282
    %286 = vrot.lane.b32.xlu0 %v284, 32
    %v287 = vpop.permute.xlu0 %286
    %v289 = vadd.f32 %v193, %v287
    %v290 = vtanh.pop %v289
    %291 = vrot.lane.b32.xlu0 %v191, 64
    %v292 = vpop.permute.xlu0 %291
    %v294 = vsub.f32 %v290, %v292
    %296 = vrot.lane.b32.xlu0 %v294, 64
    %v297 = vpop.permute.xlu0 %296
    %v299 = vmul.f32 %v279, %v297
    %v300 = vadd.f32 %v191, %v299
    %s301 = sadd.s32 %s52, 1
    %v302 = vstv %s301
    %vm303 = vcmp.lt.s32.totalorder %v302, %v60
    %v304 = vsel %vm303, 1, 0
    %305 = vset.pattern.permute.xlu0 0
    %306 = vperm.xlu0 %305, %v304
    %v307 = vpop.permute.xlu0 %306
    %vm308 = vcmp.eq.s32.totalorder %v307, 1
    %v309 = vsel %vm308, %v300, 0.0
    %s310 = scalar_lea.vmem [#allocation8], 8
    %311 = vst.msk [vmem:[%s310] sm:$0xff] %vm74, %v309
    %v312 = vsel %vm308, %v300, %v191
    %s313 = scalar_lea.vmem [#allocation3], 16
    %v314 = vld [vmem:[%s313] sm:$0xff]
    %v316 = vsel %vm74, %v312, 0
    %318 = vmatprep.subr.mxu0 0.0
    %319 = vmatpush1.msra.mxu0 %v61
    %320 = vmatprep.subr.mxu0 0.0
    %321 = vmatpush1.msra.mxu0 %v62
    %322 = vmatprep.subr.mxu0 0.0
    %323 = vmatpush1.msra.mxu0 %v63
    %324 = vmatprep.subr.mxu0 0.0
    %325 = vmatpush1.msra.mxu0 %v64
    %326 = vmatprep.subr.mxu0 0.0
    %327 = vmatpush1.msra.mxu0 0.0
    %328 = vmatprep.subr.mxu0 0.0
    %329 = vmatpush1.msra.mxu0 0.0
    %330 = vmatprep.subr.mxu0 0.0
    %331 = vmatpush1.msra.mxu0 0.0
    %332 = vmatprep.subr.mxu0 0.0
    %333 = vmatpush1.msra.mxu0 0.0
    %334 = vmatprep.subr.mxu0 0.0
    %335 = vmatpush1.msra.mxu0 0.0
    %336 = vmatprep.subr.mxu0 0.0
    %337 = vmatpush1.msra.mxu0 0.0
    %338 = vmatprep.subr.mxu0 0.0
    %339 = vmatpush1.msra.mxu0 0.0
    %340 = vmatprep.subr.mxu0 0.0
    %341 = vmatpush1.msra.mxu0 0.0
    %342 = vmatprep.subr.mxu0 0.0
    %343 = vmatpush1.msra.mxu0 0.0
    %344 = vmatprep.subr.mxu0 0.0
    %345 = vmatpush1.msra.mxu0 0.0
    %346 = vmatprep.subr.mxu0 0.0
    %347 = vmatpush1.msra.mxu0 0.0
    %348 = vmatprep.subr.mxu0 0.0
    %349 = vmatpush1.msra.mxu0 0.0
    %350 = vmatprep.subr.mxu0 0.0
    %351 = vmatpush1.msra.mxu0 0.0
    %352 = vmatprep.subr.mxu0 0.0
    %353 = vmatpush1.msra.mxu0 0.0
    %354 = vmatprep.subr.mxu0 0.0
    %355 = vmatpush1.msra.mxu0 0.0
    %356 = vmatprep.subr.mxu0 0.0
    %357 = vmatpush1.msra.mxu0 0.0
    %358 = vmatprep.subr.mxu0 0.0
    %359 = vmatpush1.msra.mxu0 0.0
    %360 = vmatprep.subr.mxu0 0.0
    %361 = vmatpush1.msra.mxu0 0.0
    %362 = vmatprep.subr.mxu0 0.0
    %363 = vmatpush1.msra.mxu0 0.0
    %364 = vmatprep.subr.mxu0 0.0
    %365 = vmatpush1.msra.mxu0 0.0
    %366 = vmatprep.subr.mxu0 0.0
    %367 = vmatpush1.msra.mxu0 0.0
    %368 = vmatprep.subr.mxu0 0.0
    %369 = vmatpush1.msra.mxu0 0.0
    %370 = vmatprep.subr.mxu0 0.0
    %371 = vmatpush1.msra.mxu0 0.0
    %372 = vmatprep.subr.mxu0 0.0
    %373 = vmatpush1.msra.mxu0 0.0
    %374 = vmatprep.subr.mxu0 0.0
    %375 = vmatpush1.msra.mxu0 0.0
    %376 = vmatprep.subr.mxu0 0.0
    %377 = vmatpush1.msra.mxu0 0.0
    %378 = vmatprep.subr.mxu0 0.0
    %379 = vmatpush1.msra.mxu0 0.0
    %380 = vmatprep.subr.mxu0 0.0
    %381 = vmatpush1.msra.mxu0 0.0
    %382 = vmatprep.mubr.f32.mxu0 0.0
    %383 = vmatmul.mubr.f32.gmra.mrb[0].mxu0 %v316
    %v384 = vpop.f32.mrb[0].mxu0
    %v385 = vadd.f32 %v72, %v384
    %v386 = vpop.f32.mrb[0].mxu0
    %387 = vdwg.mxu0
    %v388 = vadd.f32 %v314, %v385
    %v389 = vxor.u32 %v388, 2147483648
    %v390 = vmul.f32 %v389, 1.442695
    %v391 = vpow.pop %v390
    %v392 = vadd.f32 %v391, 1.0
    %v393 = vrcp.pop %v392
    %v394 = vmul.f32 1.0, %v393
    %396 = vset.pattern.permute.xlu0 96
    %397 = vperm.xlu0 %396, %v314
    %v398 = vpop.permute.xlu0 %397
    %v400 = vmul.f32 %v394, %v398
    %402 = vrot.lane.b32.xlu0 %v385, 96
    %v403 = vpop.permute.xlu0 %402
    %v405 = vmul.f32 %v394, %v403
    %407 = vrot.lane.b32.xlu0 %v405, 32
    %v408 = vpop.permute.xlu0 %407
    %v410 = vadd.f32 %v314, %v408
    %v411 = vtanh.pop %v410
    %412 = vrot.lane.b32.xlu0 %v312, 64
    %v413 = vpop.permute.xlu0 %412
    %v415 = vsub.f32 %v411, %v413
    %417 = vrot.lane.b32.xlu0 %v415, 64
    %v418 = vpop.permute.xlu0 %417
    %v420 = vmul.f32 %v400, %v418
    %v421 = vadd.f32 %v312, %v420
    %s422 = sadd.s32 %s52, 2
    %v423 = vstv %s422
    %vm424 = vcmp.lt.s32.totalorder %v423, %v60
    %v425 = vsel %vm424, 1, 0
    %426 = vset.pattern.permute.xlu0 0
    %427 = vperm.xlu0 %426, %v425
    %v428 = vpop.permute.xlu0 %427
    %vm429 = vcmp.eq.s32.totalorder %v428, 1
    %v430 = vsel %vm429, %v421, 0.0
    %s431 = scalar_lea.vmem [#allocation8], 16
    %432 = vst.msk [vmem:[%s431] sm:$0xff] %vm74, %v430
    %v433 = vsel %vm429, %v421, %v312
    %s434 = scalar_lea.vmem [#allocation3], 24
    %v435 = vld [vmem:[%s434] sm:$0xff]
    %v437 = vsel %vm74, %v433, 0
    %439 = vmatprep.subr.mxu0 0.0
    %440 = vmatpush1.msra.mxu0 %v61
    %441 = vmatprep.subr.mxu0 0.0
    %442 = vmatpush1.msra.mxu0 %v62
    %443 = vmatprep.subr.mxu0 0.0
    %444 = vmatpush1.msra.mxu0 %v63
    %445 = vmatprep.subr.mxu0 0.0
    %446 = vmatpush1.msra.mxu0 %v64
    %447 = vmatprep.subr.mxu0 0.0
    %448 = vmatpush1.msra.mxu0 0.0
    %449 = vmatprep.subr.mxu0 0.0
    %450 = vmatpush1.msra.mxu0 0.0
    %451 = vmatprep.subr.mxu0 0.0
    %452 = vmatpush1.msra.mxu0 0.0
    %453 = vmatprep.subr.mxu0 0.0
    %454 = vmatpush1.msra.mxu0 0.0
    %455 = vmatprep.subr.mxu0 0.0
    %456 = vmatpush1.msra.mxu0 0.0
    %457 = vmatprep.subr.mxu0 0.0
    %458 = vmatpush1.msra.mxu0 0.0
    %459 = vmatprep.subr.mxu0 0.0
    %460 = vmatpush1.msra.mxu0 0.0
    %461 = vmatprep.subr.mxu0 0.0
    %462 = vmatpush1.msra.mxu0 0.0
    %463 = vmatprep.subr.mxu0 0.0
    %464 = vmatpush1.msra.mxu0 0.0
    %465 = vmatprep.subr.mxu0 0.0
    %466 = vmatpush1.msra.mxu0 0.0
    %467 = vmatprep.subr.mxu0 0.0
    %468 = vmatpush1.msra.mxu0 0.0
    %469 = vmatprep.subr.mxu0 0.0
    %470 = vmatpush1.msra.mxu0 0.0
    %471 = vmatprep.subr.mxu0 0.0
    %472 = vmatpush1.msra.mxu0 0.0
    %473 = vmatprep.subr.mxu0 0.0
    %474 = vmatpush1.msra.mxu0 0.0
    %475 = vmatprep.subr.mxu0 0.0
    %476 = vmatpush1.msra.mxu0 0.0
    %477 = vmatprep.subr.mxu0 0.0
    %478 = vmatpush1.msra.mxu0 0.0
    %479 = vmatprep.subr.mxu0 0.0
    %480 = vmatpush1.msra.mxu0 0.0
    %481 = vmatprep.subr.mxu0 0.0
    %482 = vmatpush1.msra.mxu0 0.0
    %483 = vmatprep.subr.mxu0 0.0
    %484 = vmatpush1.msra.mxu0 0.0
    %485 = vmatprep.subr.mxu0 0.0
    %486 = vmatpush1.msra.mxu0 0.0
    %487 = vmatprep.subr.mxu0 0.0
    %488 = vmatpush1.msra.mxu0 0.0
    %489 = vmatprep.subr.mxu0 0.0
    %490 = vmatpush1.msra.mxu0 0.0
    %491 = vmatprep.subr.mxu0 0.0
    %492 = vmatpush1.msra.mxu0 0.0
    %493 = vmatprep.subr.mxu0 0.0
    %494 = vmatpush1.msra.mxu0 0.0
    %495 = vmatprep.subr.mxu0 0.0
    %496 = vmatpush1.msra.mxu0 0.0
    %497 = vmatprep.subr.mxu0 0.0
    %498 = vmatpush1.msra.mxu0 0.0
    %499 = vmatprep.subr.mxu0 0.0
    %500 = vmatpush1.msra.mxu0 0.0
    %501 = vmatprep.subr.mxu0 0.0
    %502 = vmatpush1.msra.mxu0 0.0
    %503 = vmatprep.mubr.f32.mxu0 0.0
    %504 = vmatmul.mubr.f32.gmra.mrb[0].mxu0 %v437
    %v505 = vpop.f32.mrb[0].mxu0
    %v506 = vadd.f32 %v72, %v505
    %v507 = vpop.f32.mrb[0].mxu0
    %508 = vdwg.mxu0
    %v509 = vadd.f32 %v435, %v506
    %v510 = vxor.u32 %v509, 2147483648
    %v511 = vmul.f32 %v510, 1.442695
    %v512 = vpow.pop %v511
    %v513 = vadd.f32 %v512, 1.0
    %v514 = vrcp.pop %v513
    %v515 = vmul.f32 1.0, %v514
    %517 = vset.pattern.permute.xlu0 96
    %518 = vperm.xlu0 %517, %v435
    %v519 = vpop.permute.xlu0 %518
    %v521 = vmul.f32 %v515, %v519
    %523 = vrot.lane.b32.xlu0 %v506, 96
    %v524 = vpop.permute.xlu0 %523
    %v526 = vmul.f32 %v515, %v524
    %528 = vrot.lane.b32.xlu0 %v526, 32
    %v529 = vpop.permute.xlu0 %528
    %v531 = vadd.f32 %v435, %v529
    %v532 = vtanh.pop %v531
    %533 = vrot.lane.b32.xlu0 %v433, 64
    %v534 = vpop.permute.xlu0 %533
    %v536 = vsub.f32 %v532, %v534
    %538 = vrot.lane.b32.xlu0 %v536, 64
    %v539 = vpop.permute.xlu0 %538
    %v541 = vmul.f32 %v521, %v539
    %v542 = vadd.f32 %v433, %v541
    %s543 = sadd.s32 %s52, 3
    %v544 = vstv %s543
    %vm545 = vcmp.lt.s32.totalorder %v544, %v60
    %v546 = vsel %vm545, 1, 0
    %547 = vset.pattern.permute.xlu0 0
    %548 = vperm.xlu0 %547, %v546
    %v549 = vpop.permute.xlu0 %548
    %vm550 = vcmp.eq.s32.totalorder %v549, 1
    %v551 = vsel %vm550, %v542, 0.0
    %s552 = scalar_lea.vmem [#allocation8], 24
    %553 = vst.msk [vmem:[%s552] sm:$0xff] %vm74, %v551
    %v554 = vsel %vm550, %v542, %v433
    %s555 = scalar_lea.vmem [#allocation3], 32
    %v556 = vld [vmem:[%s555] sm:$0xff]
    %v558 = vsel %vm74, %v554, 0
    %560 = vmatprep.subr.mxu0 0.0
    %561 = vmatpush1.msra.mxu0 %v61
    %562 = vmatprep.subr.mxu0 0.0
    %563 = vmatpush1.msra.mxu0 %v62
    %564 = vmatprep.subr.mxu0 0.0
    %565 = vmatpush1.msra.mxu0 %v63
    %566 = vmatprep.subr.mxu0 0.0
    %567 = vmatpush1.msra.mxu0 %v64
    %568 = vmatprep.subr.mxu0 0.0
    %569 = vmatpush1.msra.mxu0 0.0
    %570 = vmatprep.subr.mxu0 0.0
    %571 = vmatpush1.msra.mxu0 0.0
    %572 = vmatprep.subr.mxu0 0.0
    %573 = vmatpush1.msra.mxu0 0.0
    %574 = vmatprep.subr.mxu0 0.0
    %575 = vmatpush1.msra.mxu0 0.0
    %576 = vmatprep.subr.mxu0 0.0
    %577 = vmatpush1.msra.mxu0 0.0
    %578 = vmatprep.subr.mxu0 0.0
    %579 = vmatpush1.msra.mxu0 0.0
    %580 = vmatprep.subr.mxu0 0.0
    %581 = vmatpush1.msra.mxu0 0.0
    %582 = vmatprep.subr.mxu0 0.0
    %583 = vmatpush1.msra.mxu0 0.0
    %584 = vmatprep.subr.mxu0 0.0
    %585 = vmatpush1.msra.mxu0 0.0
    %586 = vmatprep.subr.mxu0 0.0
    %587 = vmatpush1.msra.mxu0 0.0
    %588 = vmatprep.subr.mxu0 0.0
    %589 = vmatpush1.msra.mxu0 0.0
    %590 = vmatprep.subr.mxu0 0.0
    %591 = vmatpush1.msra.mxu0 0.0
    %592 = vmatprep.subr.mxu0 0.0
    %593 = vmatpush1.msra.mxu0 0.0
    %594 = vmatprep.subr.mxu0 0.0
    %595 = vmatpush1.msra.mxu0 0.0
    %596 = vmatprep.subr.mxu0 0.0
    %597 = vmatpush1.msra.mxu0 0.0
    %598 = vmatprep.subr.mxu0 0.0
    %599 = vmatpush1.msra.mxu0 0.0
    %600 = vmatprep.subr.mxu0 0.0
    %601 = vmatpush1.msra.mxu0 0.0
    %602 = vmatprep.subr.mxu0 0.0
    %603 = vmatpush1.msra.mxu0 0.0
    %604 = vmatprep.subr.mxu0 0.0
    %605 = vmatpush1.msra.mxu0 0.0
    %606 = vmatprep.subr.mxu0 0.0
    %607 = vmatpush1.msra.mxu0 0.0
    %608 = vmatprep.subr.mxu0 0.0
    %609 = vmatpush1.msra.mxu0 0.0
    %610 = vmatprep.subr.mxu0 0.0
    %611 = vmatpush1.msra.mxu0 0.0
    %612 = vmatprep.subr.mxu0 0.0
    %613 = vmatpush1.msra.mxu0 0.0
    %614 = vmatprep.subr.mxu0 0.0
    %615 = vmatpush1.msra.mxu0 0.0
    %616 = vmatprep.subr.mxu0 0.0
    %617 = vmatpush1.msra.mxu0 0.0
    %618 = vmatprep.subr.mxu0 0.0
    %619 = vmatpush1.msra.mxu0 0.0
    %620 = vmatprep.subr.mxu0 0.0
    %621 = vmatpush1.msra.mxu0 0.0
    %622 = vmatprep.subr.mxu0 0.0
    %623 = vmatpush1.msra.mxu0 0.0
    %624 = vmatprep.mubr.f32.mxu0 0.0
    %625 = vmatmul.mubr.f32.gmra.mrb[0].mxu0 %v558
    %v626 = vpop.f32.mrb[0].mxu0
    %v627 = vadd.f32 %v72, %v626
    %v628 = vpop.f32.mrb[0].mxu0
    %629 = vdwg.mxu0
    %v630 = vadd.f32 %v556, %v627
    %v631 = vxor.u32 %v630, 2147483648
    %v632 = vmul.f32 %v631, 1.442695
    %v633 = vpow.pop %v632
    %v634 = vadd.f32 %v633, 1.0
    %v635 = vrcp.pop %v634
    %v636 = vmul.f32 1.0, %v635
    %638 = vset.pattern.permute.xlu0 96
    %639 = vperm.xlu0 %638, %v556
    %v640 = vpop.permute.xlu0 %639
    %v642 = vmul.f32 %v636, %v640
    %644 = vrot.lane.b32.xlu0 %v627, 96
    %v645 = vpop.permute.xlu0 %644
    %v647 = vmul.f32 %v636, %v645
    %649 = vrot.lane.b32.xlu0 %v647, 32
    %v650 = vpop.permute.xlu0 %649
    %v652 = vadd.f32 %v556, %v650
    %v653 = vtanh.pop %v652
    %654 = vrot.lane.b32.xlu0 %v554, 64
    %v655 = vpop.permute.xlu0 %654
    %v657 = vsub.f32 %v653, %v655
    %659 = vrot.lane.b32.xlu0 %v657, 64
    %v660 = vpop.permute.xlu0 %659
    %v662 = vmul.f32 %v642, %v660
    %v663 = vadd.f32 %v554, %v662
    %s664 = sadd.s32 %s52, 4
    %v665 = vstv %s664
    %vm666 = vcmp.lt.s32.totalorder %v665, %v60
    %v667 = vsel %vm666, 1, 0
    %668 = vset.pattern.permute.xlu0 0
    %669 = vperm.xlu0 %668, %v667
    %v670 = vpop.permute.xlu0 %669
    %vm671 = vcmp.eq.s32.totalorder %v670, 1
    %v672 = vsel %vm671, %v663, 0.0
    %s673 = scalar_lea.vmem [#allocation8], 32
    %674 = vst.msk [vmem:[%s673] sm:$0xff] %vm74, %v672
    %v675 = vsel %vm671, %v663, %v554
    %s676 = scalar_lea.vmem [#allocation3], 40
    %v677 = vld [vmem:[%s676] sm:$0xff]
    %v679 = vsel %vm74, %v675, 0
    %681 = vmatprep.subr.mxu0 0.0
    %682 = vmatpush1.msra.mxu0 %v61
    %683 = vmatprep.subr.mxu0 0.0
    %684 = vmatpush1.msra.mxu0 %v62
    %685 = vmatprep.subr.mxu0 0.0
    %686 = vmatpush1.msra.mxu0 %v63
    %687 = vmatprep.subr.mxu0 0.0
    %688 = vmatpush1.msra.mxu0 %v64
    %689 = vmatprep.subr.mxu0 0.0
    %690 = vmatpush1.msra.mxu0 0.0
    %691 = vmatprep.subr.mxu0 0.0
    %692 = vmatpush1.msra.mxu0 0.0
    %693 = vmatprep.subr.mxu0 0.0
    %694 = vmatpush1.msra.mxu0 0.0
    %695 = vmatprep.subr.mxu0 0.0
    %696 = vmatpush1.msra.mxu0 0.0
    %697 = vmatprep.subr.mxu0 0.0
    %698 = vmatpush1.msra.mxu0 0.0
    %699 = vmatprep.subr.mxu0 0.0
    %700 = vmatpush1.msra.mxu0 0.0
    %701 = vmatprep.subr.mxu0 0.0
    %702 = vmatpush1.msra.mxu0 0.0
    %703 = vmatprep.subr.mxu0 0.0
    %704 = vmatpush1.msra.mxu0 0.0
    %705 = vmatprep.subr.mxu0 0.0
    %706 = vmatpush1.msra.mxu0 0.0
    %707 = vmatprep.subr.mxu0 0.0
    %708 = vmatpush1.msra.mxu0 0.0
    %709 = vmatprep.subr.mxu0 0.0
    %710 = vmatpush1.msra.mxu0 0.0
    %711 = vmatprep.subr.mxu0 0.0
    %712 = vmatpush1.msra.mxu0 0.0
    %713 = vmatprep.subr.mxu0 0.0
    %714 = vmatpush1.msra.mxu0 0.0
    %715 = vmatprep.subr.mxu0 0.0
    %716 = vmatpush1.msra.mxu0 0.0
    %717 = vmatprep.subr.mxu0 0.0
    %718 = vmatpush1.msra.mxu0 0.0
    %719 = vmatprep.subr.mxu0 0.0
    %720 = vmatpush1.msra.mxu0 0.0
    %721 = vmatprep.subr.mxu0 0.0
    %722 = vmatpush1.msra.mxu0 0.0
    %723 = vmatprep.subr.mxu0 0.0
    %724 = vmatpush1.msra.mxu0 0.0
    %725 = vmatprep.subr.mxu0 0.0
    %726 = vmatpush1.msra.mxu0 0.0
    %727 = vmatprep.subr.mxu0 0.0
    %728 = vmatpush1.msra.mxu0 0.0
    %729 = vmatprep.subr.mxu0 0.0
    %730 = vmatpush1.msra.mxu0 0.0
    %731 = vmatprep.subr.mxu0 0.0
    %732 = vmatpush1.msra.mxu0 0.0
    %733 = vmatprep.subr.mxu0 0.0
    %734 = vmatpush1.msra.mxu0 0.0
    %735 = vmatprep.subr.mxu0 0.0
    %736 = vmatpush1.msra.mxu0 0.0
    %737 = vmatprep.subr.mxu0 0.0
    %738 = vmatpush1.msra.mxu0 0.0
    %739 = vmatprep.subr.mxu0 0.0
    %740 = vmatpush1.msra.mxu0 0.0
    %741 = vmatprep.subr.mxu0 0.0
    %742 = vmatpush1.msra.mxu0 0.0
    %743 = vmatprep.subr.mxu0 0.0
    %744 = vmatpush1.msra.mxu0 0.0
    %745 = vmatprep.mubr.f32.mxu0 0.0
    %746 = vmatmul.mubr.f32.gmra.mrb[0].mxu0 %v679
    %v747 = vpop.f32.mrb[0].mxu0
    %v748 = vadd.f32 %v72, %v747
    %v749 = vpop.f32.mrb[0].mxu0
    %750 = vdwg.mxu0
    %v751 = vadd.f32 %v677, %v748
    %v752 = vxor.u32 %v751, 2147483648
    %v753 = vmul.f32 %v752, 1.442695
    %v754 = vpow.pop %v753
    %v755 = vadd.f32 %v754, 1.0
    %v756 = vrcp.pop %v755
    %v757 = vmul.f32 1.0, %v756
    %759 = vset.pattern.permute.xlu0 96
    %760 = vperm.xlu0 %759, %v677
    %v761 = vpop.permute.xlu0 %760
    %v763 = vmul.f32 %v757, %v761
    %765 = vrot.lane.b32.xlu0 %v748, 96
    %v766 = vpop.permute.xlu0 %765
    %v768 = vmul.f32 %v757, %v766
    %770 = vrot.lane.b32.xlu0 %v768, 32
    %v771 = vpop.permute.xlu0 %770
    %v773 = vadd.f32 %v677, %v771
    %v774 = vtanh.pop %v773
    %775 = vrot.lane.b32.xlu0 %v675, 64
    %v776 = vpop.permute.xlu0 %775
    %v778 = vsub.f32 %v774, %v776
    %780 = vrot.lane.b32.xlu0 %v778, 64
    %v781 = vpop.permute.xlu0 %780
    %v783 = vmul.f32 %v763, %v781
    %v784 = vadd.f32 %v675, %v783
    %s785 = sadd.s32 %s52, 5
    %v786 = vstv %s785
    %vm787 = vcmp.lt.s32.totalorder %v786, %v60
    %v788 = vsel %vm787, 1, 0
    %789 = vset.pattern.permute.xlu0 0
    %790 = vperm.xlu0 %789, %v788
    %v791 = vpop.permute.xlu0 %790
    %vm792 = vcmp.eq.s32.totalorder %v791, 1
    %v793 = vsel %vm792, %v784, 0.0
    %s794 = scalar_lea.vmem [#allocation8], 40
    %795 = vst.msk [vmem:[%s794] sm:$0xff] %vm74, %v793
    %v796 = vsel %vm792, %v784, %v675
    %797 = vst.msk [vmem:[#allocation2] sm:$0xff] %vm74, %v796
    // Predicated region
    $region34: #{tpu_custom_call.1} parent=1 // pred_check
      %p798 = pneg %p53
    $region35: #{tpu_custom_call.1} parent=1 // pred_check_branch
      %800 = sbr.rel (%p798) target = $region37
    $region36: #{tpu_custom_call.1} parent=1 // pred_region
      %801 = vst.msk [vmem:[#allocation9] sm:$0xff] %vm74, %v796
    $region37: #{tpu_custom_call.1} parent=1 // pred_fallthru
      _
    // Predicated region
    $region38: #{tpu_custom_call.1} parent=1 // pred_check
      _
    $region39: #{tpu_custom_call.1} parent=1 // pred_check_branch
      %803 = sbr.rel (0) target = $region41
    $region40: #{tpu_custom_call.1} parent=1 // pred_region
      %s805 = ssub.s32 768, 768
      %806 = vsyncadd [#allocation5], %s805
      %s807 = sshll.u32 [#allocation8], 4
      %s808 = int_to_ptr.vmem [resolvable:$true] %s807
      %813 = dma.vmem_to_hbm [thread:$0]  %s808, 768, %s5, [#allocation5], 128, 128, 8
    $region41: #{tpu_custom_call.1} parent=1 // pred_fallthru
      _
    // Predicated region
    $region42: #{tpu_custom_call.1} parent=1 // pred_check
      _
    $region43: #{tpu_custom_call.1} parent=1 // pred_check_branch
      %815 = sbr.rel (0) target = $region45
    $region44: #{tpu_custom_call.1} parent=1 // pred_region
      %s817 = ssub.s32 128, 128
      %818 = vsyncadd [#allocation10], %s817
      %s820 = sshll.u32 [#allocation9], 4
      %s821 = int_to_ptr.vmem [resolvable:$true] %s820
      %823 = dma.vmem_to_hbm [thread:$0]  %s821, 128, %s6, [#allocation10]
    $region45: #{tpu_custom_call.1} parent=1 // pred_fallthru
      _
    // Predicated region
    $region46: #{tpu_custom_call.1} parent=1 // pred_check
      _
    $region47: #{tpu_custom_call.1} parent=1 // pred_check_branch
      %825 = sbr.rel (0) target = $region49
    $region48: #{tpu_custom_call.1} parent=1 // pred_region
      %826 = dma.done [#allocation5], 768
    $region49: #{tpu_custom_call.1} parent=1 // pred_fallthru
      _
    // Predicated region
    $region50: #{tpu_custom_call.1} parent=1 // pred_check
      _
    $region51: #{tpu_custom_call.1} parent=1 // pred_check_branch
      %828 = sbr.rel (0) target = $region53
    $region52: #{tpu_custom_call.1} parent=1 // pred_region
      %829 = dma.done [#allocation10], 128
    $region53: #{tpu_custom_call.1} parent=1 // pred_fallthru
      _
    %830 = vsyncpa [#allocation4], 1
    %831 = vsyncpa [#allocation7], 1
    %832 = vsyncpa [#allocation5], 1
    %833 = vsyncpa [#allocation10], 1

</llo_original>
